<compile_context>
chip_gen: v7x
topology: tpu7x:2x2x1
jax: 0.10.0
libtpu: 0.0.40
codegen_flags: <defaults>
</compile_context>

<pallas_src>
import jax
import jax.numpy as jnp
from jax.experimental import pallas as pl
from jax.experimental.pallas import tpu as pltpu

N_POP = 51740000.0  # self.N in the PyTorch module (fixed constant)
HIDDEN = 20
N_HIDDEN_LAYERS = 7  # fc2..fc8
OUT = 5
OUT_PAD = 8          # output rows padded to a full sublane tile
LANE = 128


def _pinn_kernel(t_ref, w1_ref, b1_ref, wh_ref, bh_ref, wout_ref, bout_ref,
                 offs_ref, scales_ref, coefs_ref, sirvd_ref, f_ref):
    t = t_ref[...]                        # (1, TB)
    w1 = w1_ref[...]                      # (20, 1)
    b1 = b1_ref[...]                      # (20, 1)

    # ---- fc1 (in_features == 1): outer-product linear.  d(t)/dt = 1, so the
    #      pre-activation tangent is just w1 broadcast along lanes. ----
    zv = w1 * t + b1                      # (20, TB)
    pos = zv > 0.0                        # ReLU'(0) := 0 (strict >), matches torch
    h = jnp.maximum(zv, 0.0)
    dh = jnp.where(pos, w1, 0.0)          # broadcast (20,1) -> (20,TB)

    # ---- fc2..fc8: value and tangent as two separate MXU dots per layer.
    #      No lane concatenation / slicing -> no extra VMEM copies. ----
    for i in range(N_HIDDEN_LAYERS):
        w = wh_ref[i]                     # (20, 20)  (out_features, in_features)
        b = bh_ref[i]                     # (20, 1)
        zv = jnp.dot(w, h, preferred_element_type=jnp.float32) + b
        zd = jnp.dot(w, dh, preferred_element_type=jnp.float32)
        pos = zv > 0.0
        h = jnp.maximum(zv, 0.0)
        dh = jnp.where(pos, zd, 0.0)

    # ---- out: Linear(20, 5) padded to 8 rows (rows 5..7 are zero weights). ----
    wout = wout_ref[...]                  # (8, 20)
    sirvd = jnp.dot(wout, h, preferred_element_type=jnp.float32) + bout_ref[...]   # (8, TB)
    dsirvd = jnp.dot(wout, dh, preferred_element_type=jnp.float32)                 # (8, TB)
    sirvd_ref[...] = sirvd                # single unmasked (8, TB) store

    # ---- SIRVD residuals as one dense (8, TB) slab (rows 5..7 are zeros). ----
    # De-normalize S, I, R: rows 0..2 of (mins + (max-min) * sirvd_hat).
    SIR = offs_ref[...] + scales_ref[...] * sirvd      # (8, TB); rows 3..7 = 0
    S = SIR[0:1, :]
    I = SIR[1:2, :]
    R = SIR[2:3, :]
    SI = S * I
    # coefs (precomputed in the wrapper) give the RHS of each ODE as a linear
    # combination of S, I, R and S*I (already divided by max-min).
    rhs = (coefs_ref[0] * S + coefs_ref[1] * I
           + coefs_ref[2] * R + coefs_ref[3] * SI)     # (8, TB)
    f_ref[...] = dsirvd - rhs             # single unmasked (8, TB) store


def _round_up(x, m):
    return ((x + m - 1) // m) * m


@jax.jit
def pinn_net_f(t_batch, w1, b1, wh, bh, wout, bout, tilda, mins, maxs):
    """Returns (sirvd_hat (T,5), f (T,5)) matching the PyTorch net_f semantics."""
    T = t_batch.shape[0]

    # Lane tile: large to amortize per-grid-step overhead, but keep >= 2 blocks
    # when there is enough work so v7x's two TensorCores both get a share of
    # the "parallel" T axis. Cap at 2048 lanes so live (20, tb) f32 slabs stay
    # modest in VMEM/vregs on every generation (incl. v7x's 64 MiB VMEM).
    if T <= 2 * LANE:
        tb = LANE
    else:
        tb = min(2048, _round_up(-(-T // 2), LANE))
    Tp = _round_up(T, tb)

    t_row = jnp.pad(t_batch[:, 0].astype(jnp.float32), (0, Tp - T)).reshape(1, Tp)

    # Transposed (out_features, in_features) layouts; output dim padded to 8.
    w1_t = w1.T.astype(jnp.float32)                            # (20, 1)
    b1_t = b1.T.astype(jnp.float32)                            # (20, 1)
    wh_t = jnp.transpose(wh, (0, 2, 1)).astype(jnp.float32)    # (7, 20, 20)
    bh_t = jnp.transpose(bh, (0, 2, 1)).astype(jnp.float32)    # (7, 20, 1)
    wout_t = jnp.pad(wout.T.astype(jnp.float32), ((0, OUT_PAD - OUT), (0, 0)))  # (8, 20)
    bout_t = jnp.pad(bout.T.astype(jnp.float32), ((0, OUT_PAD - OUT), (0, 0)))  # (8, 1)

    # Scalar parameter math (sigmoids, 1/(max-min)) done here in XLA, not in-kernel.
    rates = jax.nn.sigmoid(tilda[0])                           # (5,)
    alpha, beta, gamma, delta, sigma = (rates[k] for k in range(5))
    dmm = (maxs - mins)[0]                                     # (5,)
    dS, dI, dR, dV, dD = (dmm[k] for k in range(5))
    S_min, I_min, R_min = mins[0, 0], mins[0, 1], mins[0, 2]

    zero = jnp.zeros((), jnp.float32)
    offs = jnp.pad(jnp.stack([S_min, I_min, R_min]),
                   (0, OUT_PAD - 3)).reshape(OUT_PAD, 1)
    scales = jnp.pad(jnp.stack([dS, dI, dR]),
                     (0, OUT_PAD - 3)).reshape(OUT_PAD, 1)
    cS = jnp.stack([-alpha / dS, zero, zero, alpha / dV, zero])
    cI = jnp.stack([zero, -(gamma + delta) / dI, gamma / dR, zero, delta / dD])
    cR = jnp.stack([sigma / dS, zero, -sigma / dR, zero, zero])
    cSI = jnp.stack([-(beta / N_POP) / dS, (beta / N_POP) / dI, zero, zero, zero])
    coefs = jnp.pad(jnp.stack([cS, cI, cR, cSI]),
                    ((0, 0), (0, OUT_PAD - OUT))).reshape(4, OUT_PAD, 1)

    grid = (Tp // tb,)
    sirvd_t, f_t = pl.pallas_call(
        _pinn_kernel,
        grid=grid,
        in_specs=[
            pl.BlockSpec((1, tb), lambda i: (0, i)),                          # t (lane-tiled)
            pl.BlockSpec((HIDDEN, 1), lambda i: (0, 0)),                      # w1
            pl.BlockSpec((HIDDEN, 1), lambda i: (0, 0)),                      # b1
            pl.BlockSpec((N_HIDDEN_LAYERS, HIDDEN, HIDDEN),
                         lambda i: (0, 0, 0)),                                # wh
            pl.BlockSpec((N_HIDDEN_LAYERS, HIDDEN, 1), lambda i: (0, 0, 0)),  # bh
            pl.BlockSpec((OUT_PAD, HIDDEN), lambda i: (0, 0)),                # wout (padded)
            pl.BlockSpec((OUT_PAD, 1), lambda i: (0, 0)),                     # bout (padded)
            pl.BlockSpec((OUT_PAD, 1), lambda i: (0, 0)),                     # offs (padded)
            pl.BlockSpec((OUT_PAD, 1), lambda i: (0, 0)),                     # scales (padded)
            pl.BlockSpec((4, OUT_PAD, 1), lambda i: (0, 0, 0)),               # coefs (padded)
        ],
        out_specs=(
            pl.BlockSpec((OUT_PAD, tb), lambda i: (0, i)),
            pl.BlockSpec((OUT_PAD, tb), lambda i: (0, i)),
        ),
        out_shape=(jax.ShapeDtypeStruct((OUT_PAD, Tp), jnp.float32),   # sirvd_hat (8, Tp)
                   jax.ShapeDtypeStruct((OUT_PAD, Tp), jnp.float32)),  # [f1..f5]  (8, Tp)
        compiler_params=pltpu.CompilerParams(
            dimension_semantics=("parallel",)),   # T-tiles are independent (megacore)
    )(t_row, w1_t, b1_t, wh_t, bh_t, wout_t, bout_t, offs, scales, coefs)

    # Slice off padded rows/lanes and transpose back to (T, 5) interface.
    return sirvd_t[:OUT, :T].T, f_t[:OUT, :T].T


def _reference(t_batch, w1, b1, wh, bh, wout, bout, tilda, mins, maxs):
    """Pure-JAX reference (forward + exact d/dt), for correctness checking."""
    def mlp(t):
        h = jnp.maximum(t * w1 + b1, 0.0)
        for i in range(N_HIDDEN_LAYERS):
            h = jnp.maximum(h @ wh[i] + bh[i], 0.0)
        return h @ wout + bout

    sirvd, dsirvd = jax.jvp(mlp, (t_batch,), (jnp.ones_like(t_batch),))

    alpha, beta, gamma, delta, sigma = jax.nn.sigmoid(tilda[0])
    S_min, I_min, R_min, V_min, D_min = mins[0]
    S_max, I_max, R_max, V_max, D_max = maxs[0]

    S = S_min + (S_max - S_min) * sirvd[:, 0:1]
    I = I_min + (I_max - I_min) * sirvd[:, 1:2]
    R = R_min + (R_max - R_min) * sirvd[:, 2:3]

    f1 = dsirvd[:, 0:1] - (-(beta / N_POP) * S * I + sigma * R - alpha * S) / (S_max - S_min)
    f2 = dsirvd[:, 1:2] - ((beta / N_POP) * S * I - gamma * I - delta * I) / (I_max - I_min)
    f3 = dsirvd[:, 2:3] - (gamma * I - sigma * R) / (R_max - R_min)
    f4 = dsirvd[:, 3:4] - alpha * S / (V_max - V_min)
    f5 = dsirvd[:, 4:5] - delta * I / (D_max - D_min)
    return sirvd, jnp.concatenate([f1, f2, f3, f4, f5], axis=1)


if __name__ == "__main__":
    key = jax.random.PRNGKey(0)
    T = 64  # number of time samples

    # ---- deterministic parameter init (shapes from Net_sirvd.__init__) ----
    keys = jax.random.split(key, 16)

    def uinit(k, shape, fan_in):
        bound = 1.0 / jnp.sqrt(float(fan_in))
        return jax.random.uniform(k, shape, jnp.float32, -bound, bound)

    w1 = uinit(keys[0], (1, HIDDEN), 1)                               # fc1
    b1 = uinit(keys[1], (1, HIDDEN), 1)
    wh = uinit(keys[2], (N_HIDDEN_LAYERS, HIDDEN, HIDDEN), HIDDEN)    # fc2..fc8
    bh = uinit(keys[3], (N_HIDDEN_LAYERS, 1, HIDDEN), HIDDEN)
    wout = uinit(keys[4], (HIDDEN, OUT), HIDDEN)                      # out
    bout = uinit(keys[5], (1, OUT), HIDDEN)
    # [alpha, beta, gamma, delta, sigma]_tilda ~ torch.rand(1) each
    tilda = jax.random.uniform(keys[6], (1, OUT), jnp.float32)

    # ---- synthetic observed data S, I, R, V, D and time grid ----
    t = jnp.arange(T, dtype=jnp.float32)
    t_batch = t.reshape(T, 1)
    data = jax.random.uniform(keys[7], (OUT, T), jnp.float32, 0.0, 1000.0)
    mins = jnp.min(data, axis=1).reshape(1, OUT)
    maxs = jnp.max(data, axis=1).reshape(1, OUT)

    sirvd_hat, f_hat = pinn_net_f(t_batch, w1, b1, wh, bh, wout, bout,
                                  tilda, mins, maxs)
    jax.block_until_ready((sirvd_hat, f_hat))

    ref_sirvd, ref_f = _reference(t_batch, w1, b1, wh, bh, wout, bout,
                                  tilda, mins, maxs)
    # ReLU'(0) := 0 in both kernel and reference; random inputs never hit exact
    # zeros, so the convention is not exercised.
    assert jnp.allclose(sirvd_hat, ref_sirvd, rtol=5e-4, atol=5e-4)
    assert jnp.allclose(f_hat, ref_f, rtol=5e-4, atol=5e-4)

    print("KERNEL_OK")
</pallas_src>

<mosaic_0001>
module attributes {stable_mosaic.version = 11 : i64} {
  func.func @_pinn_kernel(%arg0: i32, %arg1: memref<1x128xf32, #tpu.memory_space<vmem>>, %arg2: memref<20x1xf32, #tpu.memory_space<vmem>>, %arg3: memref<20x1xf32, #tpu.memory_space<vmem>>, %arg4: memref<7x20x20xf32, #tpu.memory_space<vmem>>, %arg5: memref<7x20x1xf32, #tpu.memory_space<vmem>>, %arg6: memref<8x20xf32, #tpu.memory_space<vmem>>, %arg7: memref<8x1xf32, #tpu.memory_space<vmem>>, %arg8: memref<8x1xf32, #tpu.memory_space<vmem>>, %arg9: memref<8x1xf32, #tpu.memory_space<vmem>>, %arg10: memref<4x8x1xf32, #tpu.memory_space<vmem>>, %arg11: memref<8x128xf32, #tpu.memory_space<vmem>>, %arg12: memref<8x128xf32, #tpu.memory_space<vmem>>) attributes {dimension_semantics = [#tpu.dimension_semantics<parallel>], iteration_bounds = array<i64: 1>, scalar_prefetch = 0 : i64, scratch_operands = 0 : i64, tpu.core_type = #tpu.core_type<tc>, window_params = [{transform_indices = @transform_0, window_bounds = array<i64: 1, 128>}, {pipeline_mode = #tpu.pipeline_mode<synchronous>, transform_indices = @transform_1, window_bounds = array<i64: 20, 1>}, {pipeline_mode = #tpu.pipeline_mode<synchronous>, transform_indices = @transform_2, window_bounds = array<i64: 20, 1>}, {pipeline_mode = #tpu.pipeline_mode<synchronous>, transform_indices = @transform_3, window_bounds = array<i64: 7, 20, 20>}, {pipeline_mode = #tpu.pipeline_mode<synchronous>, transform_indices = @transform_4, window_bounds = array<i64: 7, 20, 1>}, {pipeline_mode = #tpu.pipeline_mode<synchronous>, transform_indices = @transform_5, window_bounds = array<i64: 8, 20>}, {pipeline_mode = #tpu.pipeline_mode<synchronous>, transform_indices = @transform_6, window_bounds = array<i64: 8, 1>}, {pipeline_mode = #tpu.pipeline_mode<synchronous>, transform_indices = @transform_7, window_bounds = array<i64: 8, 1>}, {pipeline_mode = #tpu.pipeline_mode<synchronous>, transform_indices = @transform_8, window_bounds = array<i64: 8, 1>}, {pipeline_mode = #tpu.pipeline_mode<synchronous>, transform_indices = @transform_9, window_bounds = array<i64: 4, 8, 1>}, {transform_indices = @transform_10, window_bounds = array<i64: 8, 128>}, {transform_indices = @transform_11, window_bounds = array<i64: 8, 128>}]} {
    %c0 = arith.constant 0 : index
    %c0_0 = arith.constant 0 : index
    %0 = vector.load %arg1[%c0, %c0_0] : memref<1x128xf32, #tpu.memory_space<vmem>>, vector<1x128xf32>
    %c0_1 = arith.constant 0 : index
    %c0_2 = arith.constant 0 : index
    %1 = vector.load %arg2[%c0_1, %c0_2] : memref<20x1xf32, #tpu.memory_space<vmem>>, vector<20x1xf32>
    %c0_3 = arith.constant 0 : index
    %c0_4 = arith.constant 0 : index
    %2 = vector.load %arg3[%c0_3, %c0_4] : memref<20x1xf32, #tpu.memory_space<vmem>>, vector<20x1xf32>
    %3 = vector.broadcast %1 : vector<20x1xf32> to vector<20x128xf32>
    %4 = vector.broadcast %0 : vector<1x128xf32> to vector<20x128xf32>
    %5 = arith.mulf %3, %4 : vector<20x128xf32>
    %6 = vector.broadcast %2 : vector<20x1xf32> to vector<20x128xf32>
    %7 = arith.addf %5, %6 : vector<20x128xf32>
    %cst = arith.constant 0.000000e+00 : f32
    %8 = vector.broadcast %cst : f32 to vector<20x128xf32>
    %9 = arith.cmpf ogt, %7, %8 : vector<20x128xf32>
    %cst_5 = arith.constant 0.000000e+00 : f32
    %10 = vector.broadcast %cst_5 : f32 to vector<20x128xf32>
    %11 = arith.maximumf %7, %10 : vector<20x128xf32>
    %cst_6 = arith.constant 0.000000e+00 : f32
    %12 = vector.shape_cast %1 : vector<20x1xf32> to vector<20x1xf32>
    %13 = vector.broadcast %12 : vector<20x1xf32> to vector<20x128xf32>
    %14 = vector.broadcast %cst_6 : f32 to vector<20x128xf32>
    %15 = arith.select %9, %13, %14 : vector<20x128xi1>, vector<20x128xf32>
    %c0_7 = arith.constant 0 : index
    %c0_8 = arith.constant 0 : index
    %c0_9 = arith.constant 0 : index
    %16 = vector.load %arg4[%c0_7, %c0_8, %c0_9] : memref<7x20x20xf32, #tpu.memory_space<vmem>>, vector<1x20x20xf32>
    %17 = vector.shape_cast %16 : vector<1x20x20xf32> to vector<20x20xf32>
    %c0_10 = arith.constant 0 : index
    %c0_11 = arith.constant 0 : index
    %c0_12 = arith.constant 0 : index
    %18 = vector.load %arg5[%c0_10, %c0_11, %c0_12] : memref<7x20x1xf32, #tpu.memory_space<vmem>>, vector<1x20x1xf32>
    %19 = vector.shape_cast %18 : vector<1x20x1xf32> to vector<20x1xf32>
    %cst_13 = arith.constant dense<0.000000e+00> : vector<20x128xf32>
    %20 = tpu.matmul %17, %11, %cst_13 {dimension_numbers = #tpu.dot_dimension_numbers<[1], [0], [0], [1], [0, 0, 1, 1], [], []>} : vector<20x20xf32>, vector<20x128xf32>, vector<20x128xf32> -> vector<20x128xf32>
    %21 = vector.broadcast %19 : vector<20x1xf32> to vector<20x128xf32>
    %22 = arith.addf %20, %21 : vector<20x128xf32>
    %cst_14 = arith.constant dense<0.000000e+00> : vector<20x128xf32>
    %23 = tpu.matmul %17, %15, %cst_14 {dimension_numbers = #tpu.dot_dimension_numbers<[1], [0], [0], [1], [0, 0, 1, 1], [], []>} : vector<20x20xf32>, vector<20x128xf32>, vector<20x128xf32> -> vector<20x128xf32>
    %cst_15 = arith.constant 0.000000e+00 : f32
    %24 = vector.broadcast %cst_15 : f32 to vector<20x128xf32>
    %25 = arith.cmpf ogt, %22, %24 : vector<20x128xf32>
    %cst_16 = arith.constant 0.000000e+00 : f32
    %26 = vector.broadcast %cst_16 : f32 to vector<20x128xf32>
    %27 = arith.maximumf %22, %26 : vector<20x128xf32>
    %cst_17 = arith.constant 0.000000e+00 : f32
    %28 = vector.broadcast %cst_17 : f32 to vector<20x128xf32>
    %29 = arith.select %25, %23, %28 : vector<20x128xi1>, vector<20x128xf32>
    %c1 = arith.constant 1 : index
    %c0_18 = arith.constant 0 : index
    %c0_19 = arith.constant 0 : index
    %30 = vector.load %arg4[%c1, %c0_18, %c0_19] : memref<7x20x20xf32, #tpu.memory_space<vmem>>, vector<1x20x20xf32>
    %31 = vector.shape_cast %30 : vector<1x20x20xf32> to vector<20x20xf32>
    %c1_20 = arith.constant 1 : index
    %c0_21 = arith.constant 0 : index
    %c0_22 = arith.constant 0 : index
    %32 = vector.load %arg5[%c1_20, %c0_21, %c0_22] : memref<7x20x1xf32, #tpu.memory_space<vmem>>, vector<1x20x1xf32>
    %33 = vector.shape_cast %32 : vector<1x20x1xf32> to vector<20x1xf32>
    %cst_23 = arith.constant dense<0.000000e+00> : vector<20x128xf32>
    %34 = tpu.matmul %31, %27, %cst_23 {dimension_numbers = #tpu.dot_dimension_numbers<[1], [0], [0], [1], [0, 0, 1, 1], [], []>} : vector<20x20xf32>, vector<20x128xf32>, vector<20x128xf32> -> vector<20x128xf32>
    %35 = vector.broadcast %33 : vector<20x1xf32> to vector<20x128xf32>
    %36 = arith.addf %34, %35 : vector<20x128xf32>
    %cst_24 = arith.constant dense<0.000000e+00> : vector<20x128xf32>
    %37 = tpu.matmul %31, %29, %cst_24 {dimension_numbers = #tpu.dot_dimension_numbers<[1], [0], [0], [1], [0, 0, 1, 1], [], []>} : vector<20x20xf32>, vector<20x128xf32>, vector<20x128xf32> -> vector<20x128xf32>
    %cst_25 = arith.constant 0.000000e+00 : f32
    %38 = vector.broadcast %cst_25 : f32 to vector<20x128xf32>
    %39 = arith.cmpf ogt, %36, %38 : vector<20x128xf32>
    %cst_26 = arith.constant 0.000000e+00 : f32
    %40 = vector.broadcast %cst_26 : f32 to vector<20x128xf32>
    %41 = arith.maximumf %36, %40 : vector<20x128xf32>
    %cst_27 = arith.constant 0.000000e+00 : f32
    %42 = vector.broadcast %cst_27 : f32 to vector<20x128xf32>
    %43 = arith.select %39, %37, %42 : vector<20x128xi1>, vector<20x128xf32>
    %c2 = arith.constant 2 : index
    %c0_28 = arith.constant 0 : index
    %c0_29 = arith.constant 0 : index
    %44 = vector.load %arg4[%c2, %c0_28, %c0_29] : memref<7x20x20xf32, #tpu.memory_space<vmem>>, vector<1x20x20xf32>
    %45 = vector.shape_cast %44 : vector<1x20x20xf32> to vector<20x20xf32>
    %c2_30 = arith.constant 2 : index
    %c0_31 = arith.constant 0 : index
    %c0_32 = arith.constant 0 : index
    %46 = vector.load %arg5[%c2_30, %c0_31, %c0_32] : memref<7x20x1xf32, #tpu.memory_space<vmem>>, vector<1x20x1xf32>
    %47 = vector.shape_cast %46 : vector<1x20x1xf32> to vector<20x1xf32>
    %cst_33 = arith.constant dense<0.000000e+00> : vector<20x128xf32>
    %48 = tpu.matmul %45, %41, %cst_33 {dimension_numbers = #tpu.dot_dimension_numbers<[1], [0], [0], [1], [0, 0, 1, 1], [], []>} : vector<20x20xf32>, vector<20x128xf32>, vector<20x128xf32> -> vector<20x128xf32>
    %49 = vector.broadcast %47 : vector<20x1xf32> to vector<20x128xf32>
    %50 = arith.addf %48, %49 : vector<20x128xf32>
    %cst_34 = arith.constant dense<0.000000e+00> : vector<20x128xf32>
    %51 = tpu.matmul %45, %43, %cst_34 {dimension_numbers = #tpu.dot_dimension_numbers<[1], [0], [0], [1], [0, 0, 1, 1], [], []>} : vector<20x20xf32>, vector<20x128xf32>, vector<20x128xf32> -> vector<20x128xf32>
    %cst_35 = arith.constant 0.000000e+00 : f32
    %52 = vector.broadcast %cst_35 : f32 to vector<20x128xf32>
    %53 = arith.cmpf ogt, %50, %52 : vector<20x128xf32>
    %cst_36 = arith.constant 0.000000e+00 : f32
    %54 = vector.broadcast %cst_36 : f32 to vector<20x128xf32>
    %55 = arith.maximumf %50, %54 : vector<20x128xf32>
    %cst_37 = arith.constant 0.000000e+00 : f32
    %56 = vector.broadcast %cst_37 : f32 to vector<20x128xf32>
    %57 = arith.select %53, %51, %56 : vector<20x128xi1>, vector<20x128xf32>
    %c3 = arith.constant 3 : index
    %c0_38 = arith.constant 0 : index
    %c0_39 = arith.constant 0 : index
    %58 = vector.load %arg4[%c3, %c0_38, %c0_39] : memref<7x20x20xf32, #tpu.memory_space<vmem>>, vector<1x20x20xf32>
    %59 = vector.shape_cast %58 : vector<1x20x20xf32> to vector<20x20xf32>
    %c3_40 = arith.constant 3 : index
    %c0_41 = arith.constant 0 : index
    %c0_42 = arith.constant 0 : index
    %60 = vector.load %arg5[%c3_40, %c0_41, %c0_42] : memref<7x20x1xf32, #tpu.memory_space<vmem>>, vector<1x20x1xf32>
    %61 = vector.shape_cast %60 : vector<1x20x1xf32> to vector<20x1xf32>
    %cst_43 = arith.constant dense<0.000000e+00> : vector<20x128xf32>
    %62 = tpu.matmul %59, %55, %cst_43 {dimension_numbers = #tpu.dot_dimension_numbers<[1], [0], [0], [1], [0, 0, 1, 1], [], []>} : vector<20x20xf32>, vector<20x128xf32>, vector<20x128xf32> -> vector<20x128xf32>
    %63 = vector.broadcast %61 : vector<20x1xf32> to vector<20x128xf32>
    %64 = arith.addf %62, %63 : vector<20x128xf32>
    %cst_44 = arith.constant dense<0.000000e+00> : vector<20x128xf32>
    %65 = tpu.matmul %59, %57, %cst_44 {dimension_numbers = #tpu.dot_dimension_numbers<[1], [0], [0], [1], [0, 0, 1, 1], [], []>} : vector<20x20xf32>, vector<20x128xf32>, vector<20x128xf32> -> vector<20x128xf32>
    %cst_45 = arith.constant 0.000000e+00 : f32
    %66 = vector.broadcast %cst_45 : f32 to vector<20x128xf32>
    %67 = arith.cmpf ogt, %64, %66 : vector<20x128xf32>
    %cst_46 = arith.constant 0.000000e+00 : f32
    %68 = vector.broadcast %cst_46 : f32 to vector<20x128xf32>
    %69 = arith.maximumf %64, %68 : vector<20x128xf32>
    %cst_47 = arith.constant 0.000000e+00 : f32
    %70 = vector.broadcast %cst_47 : f32 to vector<20x128xf32>
    %71 = arith.select %67, %65, %70 : vector<20x128xi1>, vector<20x128xf32>
    %c4 = arith.constant 4 : index
    %c0_48 = arith.constant 0 : index
    %c0_49 = arith.constant 0 : index
    %72 = vector.load %arg4[%c4, %c0_48, %c0_49] : memref<7x20x20xf32, #tpu.memory_space<vmem>>, vector<1x20x20xf32>
    %73 = vector.shape_cast %72 : vector<1x20x20xf32> to vector<20x20xf32>
    %c4_50 = arith.constant 4 : index
    %c0_51 = arith.constant 0 : index
    %c0_52 = arith.constant 0 : index
    %74 = vector.load %arg5[%c4_50, %c0_51, %c0_52] : memref<7x20x1xf32, #tpu.memory_space<vmem>>, vector<1x20x1xf32>
    %75 = vector.shape_cast %74 : vector<1x20x1xf32> to vector<20x1xf32>
    %cst_53 = arith.constant dense<0.000000e+00> : vector<20x128xf32>
    %76 = tpu.matmul %73, %69, %cst_53 {dimension_numbers = #tpu.dot_dimension_numbers<[1], [0], [0], [1], [0, 0, 1, 1], [], []>} : vector<20x20xf32>, vector<20x128xf32>, vector<20x128xf32> -> vector<20x128xf32>
    %77 = vector.broadcast %75 : vector<20x1xf32> to vector<20x128xf32>
    %78 = arith.addf %76, %77 : vector<20x128xf32>
    %cst_54 = arith.constant dense<0.000000e+00> : vector<20x128xf32>
    %79 = tpu.matmul %73, %71, %cst_54 {dimension_numbers = #tpu.dot_dimension_numbers<[1], [0], [0], [1], [0, 0, 1, 1], [], []>} : vector<20x20xf32>, vector<20x128xf32>, vector<20x128xf32> -> vector<20x128xf32>
    %cst_55 = arith.constant 0.000000e+00 : f32
    %80 = vector.broadcast %cst_55 : f32 to vector<20x128xf32>
    %81 = arith.cmpf ogt, %78, %80 : vector<20x128xf32>
    %cst_56 = arith.constant 0.000000e+00 : f32
    %82 = vector.broadcast %cst_56 : f32 to vector<20x128xf32>
    %83 = arith.maximumf %78, %82 : vector<20x128xf32>
    %cst_57 = arith.constant 0.000000e+00 : f32
    %84 = vector.broadcast %cst_57 : f32 to vector<20x128xf32>
    %85 = arith.select %81, %79, %84 : vector<20x128xi1>, vector<20x128xf32>
    %c5 = arith.constant 5 : index
    %c0_58 = arith.constant 0 : index
    %c0_59 = arith.constant 0 : index
    %86 = vector.load %arg4[%c5, %c0_58, %c0_59] : memref<7x20x20xf32, #tpu.memory_space<vmem>>, vector<1x20x20xf32>
    %87 = vector.shape_cast %86 : vector<1x20x20xf32> to vector<20x20xf32>
    %c5_60 = arith.constant 5 : index
    %c0_61 = arith.constant 0 : index
    %c0_62 = arith.constant 0 : index
    %88 = vector.load %arg5[%c5_60, %c0_61, %c0_62] : memref<7x20x1xf32, #tpu.memory_space<vmem>>, vector<1x20x1xf32>
    %89 = vector.shape_cast %88 : vector<1x20x1xf32> to vector<20x1xf32>
    %cst_63 = arith.constant dense<0.000000e+00> : vector<20x128xf32>
    %90 = tpu.matmul %87, %83, %cst_63 {dimension_numbers = #tpu.dot_dimension_numbers<[1], [0], [0], [1], [0, 0, 1, 1], [], []>} : vector<20x20xf32>, vector<20x128xf32>, vector<20x128xf32> -> vector<20x128xf32>
    %91 = vector.broadcast %89 : vector<20x1xf32> to vector<20x128xf32>
    %92 = arith.addf %90, %91 : vector<20x128xf32>
    %cst_64 = arith.constant dense<0.000000e+00> : vector<20x128xf32>
    %93 = tpu.matmul %87, %85, %cst_64 {dimension_numbers = #tpu.dot_dimension_numbers<[1], [0], [0], [1], [0, 0, 1, 1], [], []>} : vector<20x20xf32>, vector<20x128xf32>, vector<20x128xf32> -> vector<20x128xf32>
    %cst_65 = arith.constant 0.000000e+00 : f32
    %94 = vector.broadcast %cst_65 : f32 to vector<20x128xf32>
    %95 = arith.cmpf ogt, %92, %94 : vector<20x128xf32>
    %cst_66 = arith.constant 0.000000e+00 : f32
    %96 = vector.broadcast %cst_66 : f32 to vector<20x128xf32>
    %97 = arith.maximumf %92, %96 : vector<20x128xf32>
    %cst_67 = arith.constant 0.000000e+00 : f32
    %98 = vector.broadcast %cst_67 : f32 to vector<20x128xf32>
    %99 = arith.select %95, %93, %98 : vector<20x128xi1>, vector<20x128xf32>
    %c6 = arith.constant 6 : index
    %c0_68 = arith.constant 0 : index
    %c0_69 = arith.constant 0 : index
    %100 = vector.load %arg4[%c6, %c0_68, %c0_69] : memref<7x20x20xf32, #tpu.memory_space<vmem>>, vector<1x20x20xf32>
    %101 = vector.shape_cast %100 : vector<1x20x20xf32> to vector<20x20xf32>
    %c6_70 = arith.constant 6 : index
    %c0_71 = arith.constant 0 : index
    %c0_72 = arith.constant 0 : index
    %102 = vector.load %arg5[%c6_70, %c0_71, %c0_72] : memref<7x20x1xf32, #tpu.memory_space<vmem>>, vector<1x20x1xf32>
    %103 = vector.shape_cast %102 : vector<1x20x1xf32> to vector<20x1xf32>
    %cst_73 = arith.constant dense<0.000000e+00> : vector<20x128xf32>
    %104 = tpu.matmul %101, %97, %cst_73 {dimension_numbers = #tpu.dot_dimension_numbers<[1], [0], [0], [1], [0, 0, 1, 1], [], []>} : vector<20x20xf32>, vector<20x128xf32>, vector<20x128xf32> -> vector<20x128xf32>
    %105 = vector.broadcast %103 : vector<20x1xf32> to vector<20x128xf32>
    %106 = arith.addf %104, %105 : vector<20x128xf32>
    %cst_74 = arith.constant dense<0.000000e+00> : vector<20x128xf32>
    %107 = tpu.matmul %101, %99, %cst_74 {dimension_numbers = #tpu.dot_dimension_numbers<[1], [0], [0], [1], [0, 0, 1, 1], [], []>} : vector<20x20xf32>, vector<20x128xf32>, vector<20x128xf32> -> vector<20x128xf32>
    %cst_75 = arith.constant 0.000000e+00 : f32
    %108 = vector.broadcast %cst_75 : f32 to vector<20x128xf32>
    %109 = arith.cmpf ogt, %106, %108 : vector<20x128xf32>
    %cst_76 = arith.constant 0.000000e+00 : f32
    %110 = vector.broadcast %cst_76 : f32 to vector<20x128xf32>
    %111 = arith.maximumf %106, %110 : vector<20x128xf32>
    %cst_77 = arith.constant 0.000000e+00 : f32
    %112 = vector.broadcast %cst_77 : f32 to vector<20x128xf32>
    %113 = arith.select %109, %107, %112 : vector<20x128xi1>, vector<20x128xf32>
    %c0_78 = arith.constant 0 : index
    %c0_79 = arith.constant 0 : index
    %114 = vector.load %arg6[%c0_78, %c0_79] : memref<8x20xf32, #tpu.memory_space<vmem>>, vector<8x20xf32>
    %cst_80 = arith.constant dense<0.000000e+00> : vector<8x128xf32>
    %115 = tpu.matmul %114, %111, %cst_80 {dimension_numbers = #tpu.dot_dimension_numbers<[1], [0], [0], [1], [0, 0, 1, 1], [], []>} : vector<8x20xf32>, vector<20x128xf32>, vector<8x128xf32> -> vector<8x128xf32>
    %c0_81 = arith.constant 0 : index
    %c0_82 = arith.constant 0 : index
    %116 = vector.load %arg7[%c0_81, %c0_82] : memref<8x1xf32, #tpu.memory_space<vmem>>, vector<8x1xf32>
    %117 = vector.broadcast %116 : vector<8x1xf32> to vector<8x128xf32>
    %118 = arith.addf %115, %117 : vector<8x128xf32>
    %cst_83 = arith.constant dense<0.000000e+00> : vector<8x128xf32>
    %119 = tpu.matmul %114, %113, %cst_83 {dimension_numbers = #tpu.dot_dimension_numbers<[1], [0], [0], [1], [0, 0, 1, 1], [], []>} : vector<8x20xf32>, vector<20x128xf32>, vector<8x128xf32> -> vector<8x128xf32>
    %c0_84 = arith.constant 0 : index
    %c0_85 = arith.constant 0 : index
    %120 = vector.load %arg11[%c0_84, %c0_85] : memref<8x128xf32, #tpu.memory_space<vmem>>, vector<8x128xf32>
    tpu.vector_store %arg11[%c0_84, %c0_85], %118 {strides = array<i32>} : memref<8x128xf32, #tpu.memory_space<vmem>>, vector<8x128xf32>,
    %c0_86 = arith.constant 0 : index
    %c0_87 = arith.constant 0 : index
    %121 = vector.load %arg8[%c0_86, %c0_87] : memref<8x1xf32, #tpu.memory_space<vmem>>, vector<8x1xf32>
    %c0_88 = arith.constant 0 : index
    %c0_89 = arith.constant 0 : index
    %122 = vector.load %arg9[%c0_88, %c0_89] : memref<8x1xf32, #tpu.memory_space<vmem>>, vector<8x1xf32>
    %123 = vector.broadcast %122 : vector<8x1xf32> to vector<8x128xf32>
    %124 = arith.mulf %123, %118 : vector<8x128xf32>
    %125 = vector.broadcast %121 : vector<8x1xf32> to vector<8x128xf32>
    %126 = arith.addf %125, %124 : vector<8x128xf32>
    %127 = vector.extract_strided_slice %126 {offsets = [0, 0], sizes = [1, 128], strides = [1, 1]} : vector<8x128xf32> to vector<1x128xf32>
    %128 = vector.extract_strided_slice %126 {offsets = [1, 0], sizes = [1, 128], strides = [1, 1]} : vector<8x128xf32> to vector<1x128xf32>
    %129 = vector.extract_strided_slice %126 {offsets = [2, 0], sizes = [1, 128], strides = [1, 1]} : vector<8x128xf32> to vector<1x128xf32>
    %130 = arith.mulf %127, %128 : vector<1x128xf32>
    %c0_90 = arith.constant 0 : index
    %c0_91 = arith.constant 0 : index
    %c0_92 = arith.constant 0 : index
    %131 = vector.load %arg10[%c0_90, %c0_91, %c0_92] : memref<4x8x1xf32, #tpu.memory_space<vmem>>, vector<1x8x1xf32>
    %132 = vector.shape_cast %131 : vector<1x8x1xf32> to vector<8x1xf32>
    %133 = vector.broadcast %132 : vector<8x1xf32> to vector<8x128xf32>
    %134 = vector.broadcast %127 : vector<1x128xf32> to vector<8x128xf32>
    %135 = arith.mulf %133, %134 : vector<8x128xf32>
    %c1_93 = arith.constant 1 : index
    %c0_94 = arith.constant 0 : index
    %c0_95 = arith.constant 0 : index
    %136 = vector.load %arg10[%c1_93, %c0_94, %c0_95] : memref<4x8x1xf32, #tpu.memory_space<vmem>>, vector<1x8x1xf32>
    %137 = vector.shape_cast %136 : vector<1x8x1xf32> to vector<8x1xf32>
    %138 = vector.broadcast %137 : vector<8x1xf32> to vector<8x128xf32>
    %139 = vector.broadcast %128 : vector<1x128xf32> to vector<8x128xf32>
    %140 = arith.mulf %138, %139 : vector<8x128xf32>
    %141 = arith.addf %135, %140 : vector<8x128xf32>
    %c2_96 = arith.constant 2 : index
    %c0_97 = arith.constant 0 : index
    %c0_98 = arith.constant 0 : index
    %142 = vector.load %arg10[%c2_96, %c0_97, %c0_98] : memref<4x8x1xf32, #tpu.memory_space<vmem>>, vector<1x8x1xf32>
    %143 = vector.shape_cast %142 : vector<1x8x1xf32> to vector<8x1xf32>
    %144 = vector.broadcast %143 : vector<8x1xf32> to vector<8x128xf32>
    %145 = vector.broadcast %129 : vector<1x128xf32> to vector<8x128xf32>
    %146 = arith.mulf %144, %145 : vector<8x128xf32>
    %147 = arith.addf %141, %146 : vector<8x128xf32>
    %c3_99 = arith.constant 3 : index
    %c0_100 = arith.constant 0 : index
    %c0_101 = arith.constant 0 : index
    %148 = vector.load %arg10[%c3_99, %c0_100, %c0_101] : memref<4x8x1xf32, #tpu.memory_space<vmem>>, vector<1x8x1xf32>
    %149 = vector.shape_cast %148 : vector<1x8x1xf32> to vector<8x1xf32>
    %150 = vector.broadcast %149 : vector<8x1xf32> to vector<8x128xf32>
    %151 = vector.broadcast %130 : vector<1x128xf32> to vector<8x128xf32>
    %152 = arith.mulf %150, %151 : vector<8x128xf32>
    %153 = arith.addf %147, %152 : vector<8x128xf32>
    %154 = arith.subf %119, %153 : vector<8x128xf32>
    %c0_102 = arith.constant 0 : index
    %c0_103 = arith.constant 0 : index
    %155 = vector.load %arg12[%c0_102, %c0_103] : memref<8x128xf32, #tpu.memory_space<vmem>>, vector<8x128xf32>
    tpu.vector_store %arg12[%c0_102, %c0_103], %154 {strides = array<i32>} : memref<8x128xf32, #tpu.memory_space<vmem>>, vector<8x128xf32>,
    return
  }
  func.func @transform_0(%arg0: i32) -> (i32, i32) {
    %c0_i32 = arith.constant 0 : i32
    %c0_i32_0 = arith.constant 0 : i32
    return %c0_i32, %arg0 : i32, i32
  }
  func.func @transform_1(%arg0: i32) -> (i32, i32) {
    %c0_i32 = arith.constant 0 : i32
    %c0_i32_0 = arith.constant 0 : i32
    %c0_i32_1 = arith.constant 0 : i32
    return %c0_i32, %c0_i32_0 : i32, i32
  }
  func.func @transform_2(%arg0: i32) -> (i32, i32) {
    %c0_i32 = arith.constant 0 : i32
    %c0_i32_0 = arith.constant 0 : i32
    %c0_i32_1 = arith.constant 0 : i32
    return %c0_i32, %c0_i32_0 : i32, i32
  }
  func.func @transform_3(%arg0: i32) -> (i32, i32, i32) {
    %c0_i32 = arith.constant 0 : i32
    %c0_i32_0 = arith.constant 0 : i32
    %c0_i32_1 = arith.constant 0 : i32
    %c0_i32_2 = arith.constant 0 : i32
    return %c0_i32, %c0_i32_0, %c0_i32_1 : i32, i32, i32
  }
  func.func @transform_4(%arg0: i32) -> (i32, i32, i32) {
    %c0_i32 = arith.constant 0 : i32
    %c0_i32_0 = arith.constant 0 : i32
    %c0_i32_1 = arith.constant 0 : i32
    %c0_i32_2 = arith.constant 0 : i32
    return %c0_i32, %c0_i32_0, %c0_i32_1 : i32, i32, i32
  }
  func.func @transform_5(%arg0: i32) -> (i32, i32) {
    %c0_i32 = arith.constant 0 : i32
    %c0_i32_0 = arith.constant 0 : i32
    %c0_i32_1 = arith.constant 0 : i32
    return %c0_i32, %c0_i32_0 : i32, i32
  }
  func.func @transform_6(%arg0: i32) -> (i32, i32) {
    %c0_i32 = arith.constant 0 : i32
    %c0_i32_0 = arith.constant 0 : i32
    %c0_i32_1 = arith.constant 0 : i32
    return %c0_i32, %c0_i32_0 : i32, i32
  }
  func.func @transform_7(%arg0: i32) -> (i32, i32) {
    %c0_i32 = arith.constant 0 : i32
    %c0_i32_0 = arith.constant 0 : i32
    %c0_i32_1 = arith.constant 0 : i32
    return %c0_i32, %c0_i32_0 : i32, i32
  }
  func.func @transform_8(%arg0: i32) -> (i32, i32) {
    %c0_i32 = arith.constant 0 : i32
    %c0_i32_0 = arith.constant 0 : i32
    %c0_i32_1 = arith.constant 0 : i32
    return %c0_i32, %c0_i32_0 : i32, i32
  }
  func.func @transform_9(%arg0: i32) -> (i32, i32, i32) {
    %c0_i32 = arith.constant 0 : i32
    %c0_i32_0 = arith.constant 0 : i32
    %c0_i32_1 = arith.constant 0 : i32
    %c0_i32_2 = arith.constant 0 : i32
    return %c0_i32, %c0_i32_0, %c0_i32_1 : i32, i32, i32
  }
  func.func @transform_10(%arg0: i32) -> (i32, i32) {
    %c0_i32 = arith.constant 0 : i32
    %c0_i32_0 = arith.constant 0 : i32
    return %c0_i32, %arg0 : i32, i32
  }
  func.func @transform_11(%arg0: i32) -> (i32, i32) {
    %c0_i32 = arith.constant 0 : i32
    %c0_i32_0 = arith.constant 0 : i32
    return %c0_i32, %arg0 : i32, i32
  }
}

</mosaic_0001>

<llo_original>
// kernel: sub.1
$region0: #{sub.1}
  #allocation0 [shape = 's32[1]{0}', space=sflag, size = 0x4, scoped, tag = 'scoped memory for sub.1']
  %s0 = inlined_call_operand.vmem [shape: f32[1,5], index: 0, kind: input, shape index: {}]
  %s1 = inlined_call_operand.vmem [shape: f32[1,5], index: 1, kind: input, shape index: {}]
  %s2 = inlined_call_operand.vmem [shape: f32[1,5], index: 2, kind: output, shape index: {}]
  %v3 = vld [vmem:[%s0] sm:$0x1]
  %v4 = vld [vmem:[%s1] sm:$0x1]
  %5 = xla_tuple %v3, %v4
  %6 = xla_tuple %5
  %v7 = vsub.f32 %v3, %v4
  %8 = xla_tuple %v7
  %9 = vst [vmem:[%s2] sm:$0x1] %v7

// kernel: pinn_net_f.1
$region0: #{pinn_net_f.1}
  #allocation0 [shape = 'u32[]', space=smem, size = 0x4, offset = 0x4, fixed_abs, tag = 'smem constant byte address 0x4 - core index']
  #allocation1 [shape = 'u32[144,128]{1,0:T(1,128)}', space=vmem, size = 0x12000, scoped, tag = 'internal scratch']
  %s0 = inlined_call_operand.vmem [shape: f32[1,128], index: 0, kind: input, shape index: {}]
  %s1 = inlined_call_operand.vmem [shape: f32[20,1], index: 1, kind: input, shape index: {}]
  %s2 = inlined_call_operand.vmem [shape: f32[20,1], index: 2, kind: input, shape index: {}]
  %s3 = inlined_call_operand.vmem [shape: f32[7,20,20], index: 3, kind: input, shape index: {}]
  %s4 = inlined_call_operand.vmem [shape: f32[7,20,1], index: 4, kind: input, shape index: {}]
  %s5 = inlined_call_operand.vmem [shape: f32[8,20], index: 5, kind: input, shape index: {}]
  %s6 = inlined_call_operand.vmem [shape: f32[8,1], index: 6, kind: input, shape index: {}]
  %s7 = inlined_call_operand.vmem [shape: f32[8,1], index: 7, kind: input, shape index: {}]
  %s8 = inlined_call_operand.vmem [shape: f32[8,1], index: 8, kind: input, shape index: {}]
  %s9 = inlined_call_operand.vmem [shape: f32[4,8,1], index: 9, kind: input, shape index: {}]
  %s10 = inlined_call_operand.vmem [shape: f32[8,128], index: 10, kind: output, shape index: {0}]
  %s11 = inlined_call_operand.vmem [shape: f32[8,128], index: 11, kind: output, shape index: {1}]
  %12 = xla_tuple %s10, %s11
  %s13 = sld [smem:[#allocation0]]
  $region58: #{pinn_net_f.1} parent=0
    _
  %s15 = ssub.s32 1, %s13
  %s16 = scalar_select 0, %s15, %s13
  // Predicated region
  $region2: #{pinn_net_f.1} parent=0 // pred_check
    _
  $region3: #{pinn_net_f.1} parent=0 // pred_check_branch
    %18 = sbr.rel (0) target = $region5
  $region4: #{pinn_net_f.1} parent=0 // pred_region
    _
  $region5: #{pinn_net_f.1} parent=0 // pred_fallthru
    _
  // Predicated region
  $region6: #{pinn_net_f.1} parent=0 // pred_check
    _
  $region7: #{pinn_net_f.1} parent=0 // pred_check_branch
    %20 = sbr.rel (0) target = $region9
  $region8: #{pinn_net_f.1} parent=0 // pred_region
    _
  $region9: #{pinn_net_f.1} parent=0 // pred_fallthru
    _
  // Predicated region
  $region10: #{pinn_net_f.1} parent=0 // pred_check
    _
  $region11: #{pinn_net_f.1} parent=0 // pred_check_branch
    %22 = sbr.rel (0) target = $region13
  $region12: #{pinn_net_f.1} parent=0 // pred_region
    _
  $region13: #{pinn_net_f.1} parent=0 // pred_fallthru
    _
  // Predicated region
  $region14: #{pinn_net_f.1} parent=0 // pred_check
    _
  $region15: #{pinn_net_f.1} parent=0 // pred_check_branch
    %24 = sbr.rel (0) target = $region17
  $region16: #{pinn_net_f.1} parent=0 // pred_region
    _
  $region17: #{pinn_net_f.1} parent=0 // pred_fallthru
    _
  // Predicated region
  $region18: #{pinn_net_f.1} parent=0 // pred_check
    _
  $region19: #{pinn_net_f.1} parent=0 // pred_check_branch
    %26 = sbr.rel (0) target = $region21
  $region20: #{pinn_net_f.1} parent=0 // pred_region
    _
  $region21: #{pinn_net_f.1} parent=0 // pred_fallthru
    _
  // Predicated region
  $region22: #{pinn_net_f.1} parent=0 // pred_check
    _
  $region23: #{pinn_net_f.1} parent=0 // pred_check_branch
    %28 = sbr.rel (0) target = $region25
  $region24: #{pinn_net_f.1} parent=0 // pred_region
    _
  $region25: #{pinn_net_f.1} parent=0 // pred_fallthru
    _
  // Predicated region
  $region26: #{pinn_net_f.1} parent=0 // pred_check
    _
  $region27: #{pinn_net_f.1} parent=0 // pred_check_branch
    %30 = sbr.rel (0) target = $region29
  $region28: #{pinn_net_f.1} parent=0 // pred_region
    _
  $region29: #{pinn_net_f.1} parent=0 // pred_fallthru
    _
  // Predicated region
  $region30: #{pinn_net_f.1} parent=0 // pred_check
    _
  $region31: #{pinn_net_f.1} parent=0 // pred_check_branch
    %32 = sbr.rel (0) target = $region33
  $region32: #{pinn_net_f.1} parent=0 // pred_region
    _
  $region33: #{pinn_net_f.1} parent=0 // pred_fallthru
    _
  // Predicated region
  $region34: #{pinn_net_f.1} parent=0 // pred_check
    _
  $region35: #{pinn_net_f.1} parent=0 // pred_check_branch
    %34 = sbr.rel (0) target = $region37
  $region36: #{pinn_net_f.1} parent=0 // pred_region
    _
  $region37: #{pinn_net_f.1} parent=0 // pred_fallthru
    _
  // Predicated region
  $region38: #{pinn_net_f.1} parent=0 // pred_check
    _
  $region39: #{pinn_net_f.1} parent=0 // pred_check_branch
    %36 = sbr.rel (0) target = $region41
  $region40: #{pinn_net_f.1} parent=0 // pred_region
    _
  $region41: #{pinn_net_f.1} parent=0 // pred_fallthru
    _
  %v37 = vld [vmem:[%s0] sm:$0x1]
  %v38 = vld [vmem:[%s1] sm:$0xff]
  %v39 = vld [vmem:[%s1 + $0x8] sm:$0xff]
  %v40 = vld [vmem:[%s1 + $0x10] sm:$0xf]
  %v41 = vld [vmem:[%s2] sm:$0xff]
  %v42 = vld [vmem:[%s2 + $0x8] sm:$0xff]
  %v43 = vld [vmem:[%s2 + $0x10] sm:$0xf]
  %45 = vset.pattern.permute.xlu0 0
  %46 = vperm.xlu0 %45, %v38
  %v47 = vpop.permute.xlu0 %46
  %50 = vset.pattern.permute.xlu0 0
  %51 = vperm.xlu0 %50, %v39
  %v52 = vpop.permute.xlu0 %51
  %55 = vset.pattern.permute.xlu0 0
  %56 = vperm.xlu0 %55, %v40
  %v57 = vpop.permute.xlu0 %56
  %v60 = vlaneseq
  %v61 = vshrl.u32 %v60, 7
  %v62 = vsub.s32 0, %v61
  %v63 = vrot.slane %v37, %v62
  %v65 = vmul.f32 %v47, %v63
  %v66 = vmul.f32 %v52, %v63
  %v67 = vmul.f32 %v57, %v63
  %69 = vset.pattern.permute.xlu0 0
  %70 = vperm.xlu0 %69, %v41
  %v71 = vpop.permute.xlu0 %70
  %74 = vset.pattern.permute.xlu0 0
  %75 = vperm.xlu0 %74, %v42
  %v76 = vpop.permute.xlu0 %75
  %79 = vset.pattern.permute.xlu0 0
  %80 = vperm.xlu0 %79, %v43
  %v81 = vpop.permute.xlu0 %80
  %v83 = vadd.f32 %v65, %v71
  %v84 = vadd.f32 %v66, %v76
  %v85 = vadd.f32 %v67, %v81
  %vm86 = vcmp.gt.f32.partialorder %v83, 0.0
  %vm87 = vcmp.gt.f32.partialorder %v84, 0.0
  %vm88 = vcmp.gt.f32.partialorder %v85, 0.0
  %v89 = vmax.f32 %v83, 0.0
  %v90 = vmax.f32 %v84, 0.0
  %v91 = vmax.f32 %v85, 0.0
  %v92 = vsel %vm86, %v47, 0.0
  %v93 = vsel %vm87, %v52, 0.0
  %v94 = vsel %vm88, %v57, 0.0
  %v95 = vld [vmem:[%s3] sm:$0xff]
  %v96 = vld [vmem:[%s3 + $0x8] sm:$0xff]
  %v97 = vld [vmem:[%s3 + $0x10] sm:$0xf]
  %v98 = vld [vmem:[%s4] sm:$0xff]
  %v99 = vld [vmem:[%s4 + $0x8] sm:$0xff]
  %v100 = vld [vmem:[%s4 + $0x10] sm:$0xf]
  %102 = vset.pattern.permute.xlu0 0
  %103 = vperm.xlu0 %102, %v98
  %v104 = vpop.permute.xlu0 %103
  %107 = vset.pattern.permute.xlu0 0
  %108 = vperm.xlu0 %107, %v99
  %v109 = vpop.permute.xlu0 %108
  %112 = vset.pattern.permute.xlu0 0
  %113 = vperm.xlu0 %112, %v100
  %v114 = vpop.permute.xlu0 %113
  %vm116 = vcmask 162816
  %v118 = vsel %vm116, %v95, 0
  %v121 = vsel %vm116, %v96, 0
  %v124 = vsel %vm116, %v97, 0
  %vm126 = vcmask 1043456
  %v128 = vsel %vm126, %v91, 0
  %130 = vmatprep.subr.mxu0 0.0
  %131 = vmatpush1.msra.mxu0 %v89
  %132 = vmatprep.subr.mxu0 0.0
  %133 = vmatpush1.msra.mxu0 %v90
  %134 = vmatprep.subr.mxu0 0.0
  %135 = vmatpush1.msra.mxu0 %v128
  %136 = vmatprep.subr.mxu0 0.0
  %137 = vmatpush1.msra.mxu0 0.0
  %138 = vmatprep.subr.mxu0 0.0
  %139 = vmatpush1.msra.mxu0 0.0
  %140 = vmatprep.subr.mxu0 0.0
  %141 = vmatpush1.msra.mxu0 0.0
  %142 = vmatprep.subr.mxu0 0.0
  %143 = vmatpush1.msra.mxu0 0.0
  %144 = vmatprep.subr.mxu0 0.0
  %145 = vmatpush1.msra.mxu0 0.0
  %146 = vmatprep.subr.mxu0 0.0
  %147 = vmatpush1.msra.mxu0 0.0
  %148 = vmatprep.subr.mxu0 0.0
  %149 = vmatpush1.msra.mxu0 0.0
  %150 = vmatprep.subr.mxu0 0.0
  %151 = vmatpush1.msra.mxu0 0.0
  %152 = vmatprep.subr.mxu0 0.0
  %153 = vmatpush1.msra.mxu0 0.0
  %154 = vmatprep.subr.mxu0 0.0
  %155 = vmatpush1.msra.mxu0 0.0
  %156 = vmatprep.subr.mxu0 0.0
  %157 = vmatpush1.msra.mxu0 0.0
  %158 = vmatprep.subr.mxu0 0.0
  %159 = vmatpush1.msra.mxu0 0.0
  %160 = vmatprep.subr.mxu0 0.0
  %161 = vmatpush1.msra.mxu0 0.0
  %162 = vmatprep.subr.mxu0 0.0
  %163 = vmatpush1.msra.mxu0 0.0
  %164 = vmatprep.subr.mxu0 0.0
  %165 = vmatpush1.msra.mxu0 0.0
  %166 = vmatprep.subr.mxu0 0.0
  %167 = vmatpush1.msra.mxu0 0.0
  %168 = vmatprep.subr.mxu0 0.0
  %169 = vmatpush1.msra.mxu0 0.0
  %170 = vmatprep.subr.mxu0 0.0
  %171 = vmatpush1.msra.mxu0 0.0
  %172 = vmatprep.subr.mxu0 0.0
  %173 = vmatpush1.msra.mxu0 0.0
  %174 = vmatprep.subr.mxu0 0.0
  %175 = vmatpush1.msra.mxu0 0.0
  %176 = vmatprep.subr.mxu0 0.0
  %177 = vmatpush1.msra.mxu0 0.0
  %178 = vmatprep.subr.mxu0 0.0
  %179 = vmatpush1.msra.mxu0 0.0
  %180 = vmatprep.subr.mxu0 0.0
  %181 = vmatpush1.msra.mxu0 0.0
  %182 = vmatprep.subr.mxu0 0.0
  %183 = vmatpush1.msra.mxu0 0.0
  %184 = vmatprep.subr.mxu0 0.0
  %185 = vmatpush1.msra.mxu0 0.0
  %186 = vmatprep.subr.mxu0 0.0
  %187 = vmatpush1.msra.mxu0 0.0
  %188 = vmatprep.subr.mxu0 0.0
  %189 = vmatpush1.msra.mxu0 0.0
  %190 = vmatprep.subr.mxu0 0.0
  %191 = vmatpush1.msra.mxu0 0.0
  %192 = vmatprep.subr.mxu0 0.0
  %193 = vmatpush1.msra.mxu0 0.0
  %194 = vmatprep.mubr.f32.mxu0 0.0
  %195 = vmatmul.mubr.f32.gmra.mrb[0].mxu0 %v118
  %v196 = vpop.f32.mrb[0].mxu0
  %v197 = vadd.f32 %v104, %v196
  %v198 = vpop.f32.mrb[0].mxu0
  %199 = vmatprep.mubr.f32.mxu0 0.0
  %200 = vmatmul.mubr.f32.gmra.mrb[0].mxu0 %v121
  %v201 = vpop.f32.mrb[0].mxu0
  %v202 = vadd.f32 %v109, %v201
  %v203 = vpop.f32.mrb[0].mxu0
  %204 = vmatprep.mubr.f32.mxu0 0.0
  %205 = vmatmul.mubr.f32.gmra.mrb[0].mxu0 %v124
  %v206 = vpop.f32.mrb[0].mxu0
  %v207 = vadd.f32 %v114, %v206
  %v208 = vpop.f32.mrb[0].mxu0
  %209 = vdwg.mxu0
  %v211 = vsel %vm126, %v94, 0
  %213 = vmatprep.subr.mxu0 0.0
  %214 = vmatpush1.msra.mxu0 %v92
  %215 = vmatprep.subr.mxu0 0.0
  %216 = vmatpush1.msra.mxu0 %v93
  %217 = vmatprep.subr.mxu0 0.0
  %218 = vmatpush1.msra.mxu0 %v211
  %219 = vmatprep.subr.mxu0 0.0
  %220 = vmatpush1.msra.mxu0 0.0
  %221 = vmatprep.subr.mxu0 0.0
  %222 = vmatpush1.msra.mxu0 0.0
  %223 = vmatprep.subr.mxu0 0.0
  %224 = vmatpush1.msra.mxu0 0.0
  %225 = vmatprep.subr.mxu0 0.0
  %226 = vmatpush1.msra.mxu0 0.0
  %227 = vmatprep.subr.mxu0 0.0
  %228 = vmatpush1.msra.mxu0 0.0
  %229 = vmatprep.subr.mxu0 0.0
  %230 = vmatpush1.msra.mxu0 0.0
  %231 = vmatprep.subr.mxu0 0.0
  %232 = vmatpush1.msra.mxu0 0.0
  %233 = vmatprep.subr.mxu0 0.0
  %234 = vmatpush1.msra.mxu0 0.0
  %235 = vmatprep.subr.mxu0 0.0
  %236 = vmatpush1.msra.mxu0 0.0
  %237 = vmatprep.subr.mxu0 0.0
  %238 = vmatpush1.msra.mxu0 0.0
  %239 = vmatprep.subr.mxu0 0.0
  %240 = vmatpush1.msra.mxu0 0.0
  %241 = vmatprep.subr.mxu0 0.0
  %242 = vmatpush1.msra.mxu0 0.0
  %243 = vmatprep.subr.mxu0 0.0
  %244 = vmatpush1.msra.mxu0 0.0
  %245 = vmatprep.subr.mxu0 0.0
  %246 = vmatpush1.msra.mxu0 0.0
  %247 = vmatprep.subr.mxu0 0.0
  %248 = vmatpush1.msra.mxu0 0.0
  %249 = vmatprep.subr.mxu0 0.0
  %250 = vmatpush1.msra.mxu0 0.0
  %251 = vmatprep.subr.mxu0 0.0
  %252 = vmatpush1.msra.mxu0 0.0
  %253 = vmatprep.subr.mxu0 0.0
  %254 = vmatpush1.msra.mxu0 0.0
  %255 = vmatprep.subr.mxu0 0.0
  %256 = vmatpush1.msra.mxu0 0.0
  %257 = vmatprep.subr.mxu0 0.0
  %258 = vmatpush1.msra.mxu0 0.0
  %259 = vmatprep.subr.mxu0 0.0
  %260 = vmatpush1.msra.mxu0 0.0
  %261 = vmatprep.subr.mxu0 0.0
  %262 = vmatpush1.msra.mxu0 0.0
  %263 = vmatprep.subr.mxu0 0.0
  %264 = vmatpush1.msra.mxu0 0.0
  %265 = vmatprep.subr.mxu0 0.0
  %266 = vmatpush1.msra.mxu0 0.0
  %267 = vmatprep.subr.mxu0 0.0
  %268 = vmatpush1.msra.mxu0 0.0
  %269 = vmatprep.subr.mxu0 0.0
  %270 = vmatpush1.msra.mxu0 0.0
  %271 = vmatprep.subr.mxu0 0.0
  %272 = vmatpush1.msra.mxu0 0.0
  %273 = vmatprep.subr.mxu0 0.0
  %274 = vmatpush1.msra.mxu0 0.0
  %275 = vmatprep.subr.mxu0 0.0
  %276 = vmatpush1.msra.mxu0 0.0
  %277 = vmatprep.mubr.f32.mxu0 0.0
  %278 = vmatmul.mubr.f32.gmra.mrb[0].mxu0 %v118
  %v279 = vpop.f32.mrb[0].mxu0
  %v280 = vadd.f32 0.0, %v279
  %v281 = vpop.f32.mrb[0].mxu0
  %282 = vmatprep.mubr.f32.mxu0 0.0
  %283 = vmatmul.mubr.f32.gmra.mrb[0].mxu0 %v121
  %v284 = vpop.f32.mrb[0].mxu0
  %v285 = vadd.f32 0.0, %v284
  %v286 = vpop.f32.mrb[0].mxu0
  %287 = vmatprep.mubr.f32.mxu0 0.0
  %288 = vmatmul.mubr.f32.gmra.mrb[0].mxu0 %v124
  %v289 = vpop.f32.mrb[0].mxu0
  %v290 = vadd.f32 0.0, %v289
  %v291 = vpop.f32.mrb[0].mxu0
  %292 = vdwg.mxu0
  %vm293 = vcmp.gt.f32.partialorder %v197, 0.0
  %vm294 = vcmp.gt.f32.partialorder %v202, 0.0
  %vm295 = vcmp.gt.f32.partialorder %v207, 0.0
  %v296 = vmax.f32 %v197, 0.0
  %v297 = vmax.f32 %v202, 0.0
  %v298 = vmax.f32 %v207, 0.0
  %v299 = vsel %vm293, %v280, 0.0
  %v300 = vsel %vm294, %v285, 0.0
  %v301 = vsel %vm295, %v290, 0.0
  %s302 = scalar_lea.vmem %s3, 24
  %v303 = vld [vmem:[%s302] sm:$0xff]
  %v304 = vld [vmem:[%s302 + $0x8] sm:$0xff]
  %v305 = vld [vmem:[%s302 + $0x10] sm:$0xf]
  %s306 = scalar_lea.vmem %s4, 24
  %v307 = vld [vmem:[%s306] sm:$0xff]
  %v308 = vld [vmem:[%s306 + $0x8] sm:$0xff]
  %v309 = vld [vmem:[%s306 + $0x10] sm:$0xf]
  %311 = vset.pattern.permute.xlu0 0
  %312 = vperm.xlu0 %311, %v307
  %v313 = vpop.permute.xlu0 %312
  %316 = vset.pattern.permute.xlu0 0
  %317 = vperm.xlu0 %316, %v308
  %v318 = vpop.permute.xlu0 %317
  %321 = vset.pattern.permute.xlu0 0
  %322 = vperm.xlu0 %321, %v309
  %v323 = vpop.permute.xlu0 %322
  %v326 = vsel %vm116, %v303, 0
  %v329 = vsel %vm116, %v304, 0
  %v332 = vsel %vm116, %v305, 0
  %v335 = vsel %vm126, %v298, 0
  %337 = vmatprep.subr.mxu0 0.0
  %338 = vmatpush1.msra.mxu0 %v296
  %339 = vmatprep.subr.mxu0 0.0
  %340 = vmatpush1.msra.mxu0 %v297
  %341 = vmatprep.subr.mxu0 0.0
  %342 = vmatpush1.msra.mxu0 %v335
  %343 = vmatprep.subr.mxu0 0.0
  %344 = vmatpush1.msra.mxu0 0.0
  %345 = vmatprep.subr.mxu0 0.0
  %346 = vmatpush1.msra.mxu0 0.0
  %347 = vmatprep.subr.mxu0 0.0
  %348 = vmatpush1.msra.mxu0 0.0
  %349 = vmatprep.subr.mxu0 0.0
  %350 = vmatpush1.msra.mxu0 0.0
  %351 = vmatprep.subr.mxu0 0.0
  %352 = vmatpush1.msra.mxu0 0.0
  %353 = vmatprep.subr.mxu0 0.0
  %354 = vmatpush1.msra.mxu0 0.0
  %355 = vmatprep.subr.mxu0 0.0
  %356 = vmatpush1.msra.mxu0 0.0
  %357 = vmatprep.subr.mxu0 0.0
  %358 = vmatpush1.msra.mxu0 0.0
  %359 = vmatprep.subr.mxu0 0.0
  %360 = vmatpush1.msra.mxu0 0.0
  %361 = vmatprep.subr.mxu0 0.0
  %362 = vmatpush1.msra.mxu0 0.0
  %363 = vmatprep.subr.mxu0 0.0
  %364 = vmatpush1.msra.mxu0 0.0
  %365 = vmatprep.subr.mxu0 0.0
  %366 = vmatpush1.msra.mxu0 0.0
  %367 = vmatprep.subr.mxu0 0.0
  %368 = vmatpush1.msra.mxu0 0.0
  %369 = vmatprep.subr.mxu0 0.0
  %370 = vmatpush1.msra.mxu0 0.0
  %371 = vmatprep.subr.mxu0 0.0
  %372 = vmatpush1.msra.mxu0 0.0
  %373 = vmatprep.subr.mxu0 0.0
  %374 = vmatpush1.msra.mxu0 0.0
  %375 = vmatprep.subr.mxu0 0.0
  %376 = vmatpush1.msra.mxu0 0.0
  %377 = vmatprep.subr.mxu0 0.0
  %378 = vmatpush1.msra.mxu0 0.0
  %379 = vmatprep.subr.mxu0 0.0
  %380 = vmatpush1.msra.mxu0 0.0
  %381 = vmatprep.subr.mxu0 0.0
  %382 = vmatpush1.msra.mxu0 0.0
  %383 = vmatprep.subr.mxu0 0.0
  %384 = vmatpush1.msra.mxu0 0.0
  %385 = vmatprep.subr.mxu0 0.0
  %386 = vmatpush1.msra.mxu0 0.0
  %387 = vmatprep.subr.mxu0 0.0
  %388 = vmatpush1.msra.mxu0 0.0
  %389 = vmatprep.subr.mxu0 0.0
  %390 = vmatpush1.msra.mxu0 0.0
  %391 = vmatprep.subr.mxu0 0.0
  %392 = vmatpush1.msra.mxu0 0.0
  %393 = vmatprep.subr.mxu0 0.0
  %394 = vmatpush1.msra.mxu0 0.0
  %395 = vmatprep.subr.mxu0 0.0
  %396 = vmatpush1.msra.mxu0 0.0
  %397 = vmatprep.subr.mxu0 0.0
  %398 = vmatpush1.msra.mxu0 0.0
  %399 = vmatprep.subr.mxu0 0.0
  %400 = vmatpush1.msra.mxu0 0.0
  %401 = vmatprep.mubr.f32.mxu0 0.0
  %402 = vmatmul.mubr.f32.gmra.mrb[0].mxu0 %v326
  %v403 = vpop.f32.mrb[0].mxu0
  %v404 = vadd.f32 %v313, %v403
  %v405 = vpop.f32.mrb[0].mxu0
  %406 = vmatprep.mubr.f32.mxu0 0.0
  %407 = vmatmul.mubr.f32.gmra.mrb[0].mxu0 %v329
  %v408 = vpop.f32.mrb[0].mxu0
  %v409 = vadd.f32 %v318, %v408
  %v410 = vpop.f32.mrb[0].mxu0
  %411 = vmatprep.mubr.f32.mxu0 0.0
  %412 = vmatmul.mubr.f32.gmra.mrb[0].mxu0 %v332
  %v413 = vpop.f32.mrb[0].mxu0
  %v414 = vadd.f32 %v323, %v413
  %v415 = vpop.f32.mrb[0].mxu0
  %416 = vdwg.mxu0
  %v418 = vsel %vm126, %v301, 0
  %420 = vmatprep.subr.mxu0 0.0
  %421 = vmatpush1.msra.mxu0 %v299
  %422 = vmatprep.subr.mxu0 0.0
  %423 = vmatpush1.msra.mxu0 %v300
  %424 = vmatprep.subr.mxu0 0.0
  %425 = vmatpush1.msra.mxu0 %v418
  %426 = vmatprep.subr.mxu0 0.0
  %427 = vmatpush1.msra.mxu0 0.0
  %428 = vmatprep.subr.mxu0 0.0
  %429 = vmatpush1.msra.mxu0 0.0
  %430 = vmatprep.subr.mxu0 0.0
  %431 = vmatpush1.msra.mxu0 0.0
  %432 = vmatprep.subr.mxu0 0.0
  %433 = vmatpush1.msra.mxu0 0.0
  %434 = vmatprep.subr.mxu0 0.0
  %435 = vmatpush1.msra.mxu0 0.0
  %436 = vmatprep.subr.mxu0 0.0
  %437 = vmatpush1.msra.mxu0 0.0
  %438 = vmatprep.subr.mxu0 0.0
  %439 = vmatpush1.msra.mxu0 0.0
  %440 = vmatprep.subr.mxu0 0.0
  %441 = vmatpush1.msra.mxu0 0.0
  %442 = vmatprep.subr.mxu0 0.0
  %443 = vmatpush1.msra.mxu0 0.0
  %444 = vmatprep.subr.mxu0 0.0
  %445 = vmatpush1.msra.mxu0 0.0
  %446 = vmatprep.subr.mxu0 0.0
  %447 = vmatpush1.msra.mxu0 0.0
  %448 = vmatprep.subr.mxu0 0.0
  %449 = vmatpush1.msra.mxu0 0.0
  %450 = vmatprep.subr.mxu0 0.0
  %451 = vmatpush1.msra.mxu0 0.0
  %452 = vmatprep.subr.mxu0 0.0
  %453 = vmatpush1.msra.mxu0 0.0
  %454 = vmatprep.subr.mxu0 0.0
  %455 = vmatpush1.msra.mxu0 0.0
  %456 = vmatprep.subr.mxu0 0.0
  %457 = vmatpush1.msra.mxu0 0.0
  %458 = vmatprep.subr.mxu0 0.0
  %459 = vmatpush1.msra.mxu0 0.0
  %460 = vmatprep.subr.mxu0 0.0
  %461 = vmatpush1.msra.mxu0 0.0
  %462 = vmatprep.subr.mxu0 0.0
  %463 = vmatpush1.msra.mxu0 0.0
  %464 = vmatprep.subr.mxu0 0.0
  %465 = vmatpush1.msra.mxu0 0.0
  %466 = vmatprep.subr.mxu0 0.0
  %467 = vmatpush1.msra.mxu0 0.0
  %468 = vmatprep.subr.mxu0 0.0
  %469 = vmatpush1.msra.mxu0 0.0
  %470 = vmatprep.subr.mxu0 0.0
  %471 = vmatpush1.msra.mxu0 0.0
  %472 = vmatprep.subr.mxu0 0.0
  %473 = vmatpush1.msra.mxu0 0.0
  %474 = vmatprep.subr.mxu0 0.0
  %475 = vmatpush1.msra.mxu0 0.0
  %476 = vmatprep.subr.mxu0 0.0
  %477 = vmatpush1.msra.mxu0 0.0
  %478 = vmatprep.subr.mxu0 0.0
  %479 = vmatpush1.msra.mxu0 0.0
  %480 = vmatprep.subr.mxu0 0.0
  %481 = vmatpush1.msra.mxu0 0.0
  %482 = vmatprep.subr.mxu0 0.0
  %483 = vmatpush1.msra.mxu0 0.0
  %484 = vmatprep.mubr.f32.mxu0 0.0
  %485 = vmatmul.mubr.f32.gmra.mrb[0].mxu0 %v326
  %v486 = vpop.f32.mrb[0].mxu0
  %v487 = vadd.f32 0.0, %v486
  %v488 = vpop.f32.mrb[0].mxu0
  %489 = vmatprep.mubr.f32.mxu0 0.0
  %490 = vmatmul.mubr.f32.gmra.mrb[0].mxu0 %v329
  %v491 = vpop.f32.mrb[0].mxu0
  %v492 = vadd.f32 0.0, %v491
  %v493 = vpop.f32.mrb[0].mxu0
  %494 = vmatprep.mubr.f32.mxu0 0.0
  %495 = vmatmul.mubr.f32.gmra.mrb[0].mxu0 %v332
  %v496 = vpop.f32.mrb[0].mxu0
  %v497 = vadd.f32 0.0, %v496
  %v498 = vpop.f32.mrb[0].mxu0
  %499 = vdwg.mxu0
  %vm500 = vcmp.gt.f32.partialorder %v404, 0.0
  %vm501 = vcmp.gt.f32.partialorder %v409, 0.0
  %vm502 = vcmp.gt.f32.partialorder %v414, 0.0
  %v503 = vmax.f32 %v404, 0.0
  %v504 = vmax.f32 %v409, 0.0
  %v505 = vmax.f32 %v414, 0.0
  %v506 = vsel %vm500, %v487, 0.0
  %v507 = vsel %vm501, %v492, 0.0
  %v508 = vsel %vm502, %v497, 0.0
  %s509 = scalar_lea.vmem %s3, 48
  %v510 = vld [vmem:[%s509] sm:$0xff]
  %v511 = vld [vmem:[%s509 + $0x8] sm:$0xff]
  %v512 = vld [vmem:[%s509 + $0x10] sm:$0xf]
  %s513 = scalar_lea.vmem %s4, 48
  %v514 = vld [vmem:[%s513] sm:$0xff]
  %v515 = vld [vmem:[%s513 + $0x8] sm:$0xff]
  %v516 = vld [vmem:[%s513 + $0x10] sm:$0xf]
  %518 = vset.pattern.permute.xlu0 0
  %519 = vperm.xlu0 %518, %v514
  %v520 = vpop.permute.xlu0 %519
  %523 = vset.pattern.permute.xlu0 0
  %524 = vperm.xlu0 %523, %v515
  %v525 = vpop.permute.xlu0 %524
  %528 = vset.pattern.permute.xlu0 0
  %529 = vperm.xlu0 %528, %v516
  %v530 = vpop.permute.xlu0 %529
  %v533 = vsel %vm116, %v510, 0
  %v536 = vsel %vm116, %v511, 0
  %v539 = vsel %vm116, %v512, 0
  %v542 = vsel %vm126, %v505, 0
  %544 = vmatprep.subr.mxu0 0.0
  %545 = vmatpush1.msra.mxu0 %v503
  %546 = vmatprep.subr.mxu0 0.0
  %547 = vmatpush1.msra.mxu0 %v504
  %548 = vmatprep.subr.mxu0 0.0
  %549 = vmatpush1.msra.mxu0 %v542
  %550 = vmatprep.subr.mxu0 0.0
  %551 = vmatpush1.msra.mxu0 0.0
  %552 = vmatprep.subr.mxu0 0.0
  %553 = vmatpush1.msra.mxu0 0.0
  %554 = vmatprep.subr.mxu0 0.0
  %555 = vmatpush1.msra.mxu0 0.0
  %556 = vmatprep.subr.mxu0 0.0
  %557 = vmatpush1.msra.mxu0 0.0
  %558 = vmatprep.subr.mxu0 0.0
  %559 = vmatpush1.msra.mxu0 0.0
  %560 = vmatprep.subr.mxu0 0.0
  %561 = vmatpush1.msra.mxu0 0.0
  %562 = vmatprep.subr.mxu0 0.0
  %563 = vmatpush1.msra.mxu0 0.0
  %564 = vmatprep.subr.mxu0 0.0
  %565 = vmatpush1.msra.mxu0 0.0
  %566 = vmatprep.subr.mxu0 0.0
  %567 = vmatpush1.msra.mxu0 0.0
  %568 = vmatprep.subr.mxu0 0.0
  %569 = vmatpush1.msra.mxu0 0.0
  %570 = vmatprep.subr.mxu0 0.0
  %571 = vmatpush1.msra.mxu0 0.0
  %572 = vmatprep.subr.mxu0 0.0
  %573 = vmatpush1.msra.mxu0 0.0
  %574 = vmatprep.subr.mxu0 0.0
  %575 = vmatpush1.msra.mxu0 0.0
  %576 = vmatprep.subr.mxu0 0.0
  %577 = vmatpush1.msra.mxu0 0.0
  %578 = vmatprep.subr.mxu0 0.0
  %579 = vmatpush1.msra.mxu0 0.0
  %580 = vmatprep.subr.mxu0 0.0
  %581 = vmatpush1.msra.mxu0 0.0
  %582 = vmatprep.subr.mxu0 0.0
  %583 = vmatpush1.msra.mxu0 0.0
  %584 = vmatprep.subr.mxu0 0.0
  %585 = vmatpush1.msra.mxu0 0.0
  %586 = vmatprep.subr.mxu0 0.0
  %587 = vmatpush1.msra.mxu0 0.0
  %588 = vmatprep.subr.mxu0 0.0
  %589 = vmatpush1.msra.mxu0 0.0
  %590 = vmatprep.subr.mxu0 0.0
  %591 = vmatpush1.msra.mxu0 0.0
  %592 = vmatprep.subr.mxu0 0.0
  %593 = vmatpush1.msra.mxu0 0.0
  %594 = vmatprep.subr.mxu0 0.0
  %595 = vmatpush1.msra.mxu0 0.0
  %596 = vmatprep.subr.mxu0 0.0
  %597 = vmatpush1.msra.mxu0 0.0
  %598 = vmatprep.subr.mxu0 0.0
  %599 = vmatpush1.msra.mxu0 0.0
  %600 = vmatprep.subr.mxu0 0.0
  %601 = vmatpush1.msra.mxu0 0.0
  %602 = vmatprep.subr.mxu0 0.0
  %603 = vmatpush1.msra.mxu0 0.0
  %604 = vmatprep.subr.mxu0 0.0
  %605 = vmatpush1.msra.mxu0 0.0
  %606 = vmatprep.subr.mxu0 0.0
  %607 = vmatpush1.msra.mxu0 0.0
  %608 = vmatprep.mubr.f32.mxu0 0.0
  %609 = vmatmul.mubr.f32.gmra.mrb[0].mxu0 %v533
  %v610 = vpop.f32.mrb[0].mxu0
  %v611 = vadd.f32 %v520, %v610
  %v612 = vpop.f32.mrb[0].mxu0
  %613 = vmatprep.mubr.f32.mxu0 0.0
  %614 = vmatmul.mubr.f32.gmra.mrb[0].mxu0 %v536
  %v615 = vpop.f32.mrb[0].mxu0
  %v616 = vadd.f32 %v525, %v615
  %v617 = vpop.f32.mrb[0].mxu0
  %618 = vmatprep.mubr.f32.mxu0 0.0
  %619 = vmatmul.mubr.f32.gmra.mrb[0].mxu0 %v539
  %v620 = vpop.f32.mrb[0].mxu0
  %v621 = vadd.f32 %v530, %v620
  %v622 = vpop.f32.mrb[0].mxu0
  %623 = vdwg.mxu0
  %v625 = vsel %vm126, %v508, 0
  %627 = vmatprep.subr.mxu0 0.0
  %628 = vmatpush1.msra.mxu0 %v506
  %629 = vmatprep.subr.mxu0 0.0
  %630 = vmatpush1.msra.mxu0 %v507
  %631 = vmatprep.subr.mxu0 0.0
  %632 = vmatpush1.msra.mxu0 %v625
  %633 = vmatprep.subr.mxu0 0.0
  %634 = vmatpush1.msra.mxu0 0.0
  %635 = vmatprep.subr.mxu0 0.0
  %636 = vmatpush1.msra.mxu0 0.0
  %637 = vmatprep.subr.mxu0 0.0
  %638 = vmatpush1.msra.mxu0 0.0
  %639 = vmatprep.subr.mxu0 0.0
  %640 = vmatpush1.msra.mxu0 0.0
  %641 = vmatprep.subr.mxu0 0.0
  %642 = vmatpush1.msra.mxu0 0.0
  %643 = vmatprep.subr.mxu0 0.0
  %644 = vmatpush1.msra.mxu0 0.0
  %645 = vmatprep.subr.mxu0 0.0
  %646 = vmatpush1.msra.mxu0 0.0
  %647 = vmatprep.subr.mxu0 0.0
  %648 = vmatpush1.msra.mxu0 0.0
  %649 = vmatprep.subr.mxu0 0.0
  %650 = vmatpush1.msra.mxu0 0.0
  %651 = vmatprep.subr.mxu0 0.0
  %652 = vmatpush1.msra.mxu0 0.0
  %653 = vmatprep.subr.mxu0 0.0
  %654 = vmatpush1.msra.mxu0 0.0
  %655 = vmatprep.subr.mxu0 0.0
  %656 = vmatpush1.msra.mxu0 0.0
  %657 = vmatprep.subr.mxu0 0.0
  %658 = vmatpush1.msra.mxu0 0.0
  %659 = vmatprep.subr.mxu0 0.0
  %660 = vmatpush1.msra.mxu0 0.0
  %661 = vmatprep.subr.mxu0 0.0
  %662 = vmatpush1.msra.mxu0 0.0
  %663 = vmatprep.subr.mxu0 0.0
  %664 = vmatpush1.msra.mxu0 0.0
  %665 = vmatprep.subr.mxu0 0.0
  %666 = vmatpush1.msra.mxu0 0.0
  %667 = vmatprep.subr.mxu0 0.0
  %668 = vmatpush1.msra.mxu0 0.0
  %669 = vmatprep.subr.mxu0 0.0
  %670 = vmatpush1.msra.mxu0 0.0
  %671 = vmatprep.subr.mxu0 0.0
  %672 = vmatpush1.msra.mxu0 0.0
  %673 = vmatprep.subr.mxu0 0.0
  %674 = vmatpush1.msra.mxu0 0.0
  %675 = vmatprep.subr.mxu0 0.0
  %676 = vmatpush1.msra.mxu0 0.0
  %677 = vmatprep.subr.mxu0 0.0
  %678 = vmatpush1.msra.mxu0 0.0
  %679 = vmatprep.subr.mxu0 0.0
  %680 = vmatpush1.msra.mxu0 0.0
  %681 = vmatprep.subr.mxu0 0.0
  %682 = vmatpush1.msra.mxu0 0.0
  %683 = vmatprep.subr.mxu0 0.0
  %684 = vmatpush1.msra.mxu0 0.0
  %685 = vmatprep.subr.mxu0 0.0
  %686 = vmatpush1.msra.mxu0 0.0
  %687 = vmatprep.subr.mxu0 0.0
  %688 = vmatpush1.msra.mxu0 0.0
  %689 = vmatprep.subr.mxu0 0.0
  %690 = vmatpush1.msra.mxu0 0.0
  %691 = vmatprep.mubr.f32.mxu0 0.0
  %692 = vmatmul.mubr.f32.gmra.mrb[0].mxu0 %v533
  %v693 = vpop.f32.mrb[0].mxu0
  %v694 = vadd.f32 0.0, %v693
  %v695 = vpop.f32.mrb[0].mxu0
  %696 = vmatprep.mubr.f32.mxu0 0.0
  %697 = vmatmul.mubr.f32.gmra.mrb[0].mxu0 %v536
  %v698 = vpop.f32.mrb[0].mxu0
  %v699 = vadd.f32 0.0, %v698
  %v700 = vpop.f32.mrb[0].mxu0
  %701 = vmatprep.mubr.f32.mxu0 0.0
  %702 = vmatmul.mubr.f32.gmra.mrb[0].mxu0 %v539
  %v703 = vpop.f32.mrb[0].mxu0
  %v704 = vadd.f32 0.0, %v703
  %v705 = vpop.f32.mrb[0].mxu0
  %706 = vdwg.mxu0
  %vm707 = vcmp.gt.f32.partialorder %v611, 0.0
  %vm708 = vcmp.gt.f32.partialorder %v616, 0.0
  %vm709 = vcmp.gt.f32.partialorder %v621, 0.0
  %v710 = vmax.f32 %v611, 0.0
  %v711 = vmax.f32 %v616, 0.0
  %v712 = vmax.f32 %v621, 0.0
  %v713 = vsel %vm707, %v694, 0.0
  %v714 = vsel %vm708, %v699, 0.0
  %v715 = vsel %vm709, %v704, 0.0
  %s716 = scalar_lea.vmem %s3, 72
  %v717 = vld [vmem:[%s716] sm:$0xff]
  %v718 = vld [vmem:[%s716 + $0x8] sm:$0xff]
  %v719 = vld [vmem:[%s716 + $0x10] sm:$0xf]
  %s720 = scalar_lea.vmem %s4, 72
  %v721 = vld [vmem:[%s720] sm:$0xff]
  %v722 = vld [vmem:[%s720 + $0x8] sm:$0xff]
  %v723 = vld [vmem:[%s720 + $0x10] sm:$0xf]
  %725 = vset.pattern.permute.xlu0 0
  %726 = vperm.xlu0 %725, %v721
  %v727 = vpop.permute.xlu0 %726
  %730 = vset.pattern.permute.xlu0 0
  %731 = vperm.xlu0 %730, %v722
  %v732 = vpop.permute.xlu0 %731
  %735 = vset.pattern.permute.xlu0 0
  %736 = vperm.xlu0 %735, %v723
  %v737 = vpop.permute.xlu0 %736
  %v740 = vsel %vm116, %v717, 0
  %v743 = vsel %vm116, %v718, 0
  %v746 = vsel %vm116, %v719, 0
  %v749 = vsel %vm126, %v712, 0
  %751 = vmatprep.subr.mxu0 0.0
  %752 = vmatpush1.msra.mxu0 %v710
  %753 = vmatprep.subr.mxu0 0.0
  %754 = vmatpush1.msra.mxu0 %v711
  %755 = vmatprep.subr.mxu0 0.0
  %756 = vmatpush1.msra.mxu0 %v749
  %757 = vmatprep.subr.mxu0 0.0
  %758 = vmatpush1.msra.mxu0 0.0
  %759 = vmatprep.subr.mxu0 0.0
  %760 = vmatpush1.msra.mxu0 0.0
  %761 = vmatprep.subr.mxu0 0.0
  %762 = vmatpush1.msra.mxu0 0.0
  %763 = vmatprep.subr.mxu0 0.0
  %764 = vmatpush1.msra.mxu0 0.0
  %765 = vmatprep.subr.mxu0 0.0
  %766 = vmatpush1.msra.mxu0 0.0
  %767 = vmatprep.subr.mxu0 0.0
  %768 = vmatpush1.msra.mxu0 0.0
  %769 = vmatprep.subr.mxu0 0.0
  %770 = vmatpush1.msra.mxu0 0.0
  %771 = vmatprep.subr.mxu0 0.0
  %772 = vmatpush1.msra.mxu0 0.0
  %773 = vmatprep.subr.mxu0 0.0
  %774 = vmatpush1.msra.mxu0 0.0
  %775 = vmatprep.subr.mxu0 0.0
  %776 = vmatpush1.msra.mxu0 0.0
  %777 = vmatprep.subr.mxu0 0.0
  %778 = vmatpush1.msra.mxu0 0.0
  %779 = vmatprep.subr.mxu0 0.0
  %780 = vmatpush1.msra.mxu0 0.0
  %781 = vmatprep.subr.mxu0 0.0
  %782 = vmatpush1.msra.mxu0 0.0
  %783 = vmatprep.subr.mxu0 0.0
  %784 = vmatpush1.msra.mxu0 0.0
  %785 = vmatprep.subr.mxu0 0.0
  %786 = vmatpush1.msra.mxu0 0.0
  %787 = vmatprep.subr.mxu0 0.0
  %788 = vmatpush1.msra.mxu0 0.0
  %789 = vmatprep.subr.mxu0 0.0
  %790 = vmatpush1.msra.mxu0 0.0
  %791 = vmatprep.subr.mxu0 0.0
  %792 = vmatpush1.msra.mxu0 0.0
  %793 = vmatprep.subr.mxu0 0.0
  %794 = vmatpush1.msra.mxu0 0.0
  %795 = vmatprep.subr.mxu0 0.0
  %796 = vmatpush1.msra.mxu0 0.0
  %797 = vmatprep.subr.mxu0 0.0
  %798 = vmatpush1.msra.mxu0 0.0
  %799 = vmatprep.subr.mxu0 0.0
  %800 = vmatpush1.msra.mxu0 0.0
  %801 = vmatprep.subr.mxu0 0.0
  %802 = vmatpush1.msra.mxu0 0.0
  %803 = vmatprep.subr.mxu0 0.0
  %804 = vmatpush1.msra.mxu0 0.0
  %805 = vmatprep.subr.mxu0 0.0
  %806 = vmatpush1.msra.mxu0 0.0
  %807 = vmatprep.subr.mxu0 0.0
  %808 = vmatpush1.msra.mxu0 0.0
  %809 = vmatprep.subr.mxu0 0.0
  %810 = vmatpush1.msra.mxu0 0.0
  %811 = vmatprep.subr.mxu0 0.0
  %812 = vmatpush1.msra.mxu0 0.0
  %813 = vmatprep.subr.mxu0 0.0
  %814 = vmatpush1.msra.mxu0 0.0
  %815 = vmatprep.mubr.f32.mxu0 0.0
  %816 = vmatmul.mubr.f32.gmra.mrb[0].mxu0 %v740
  %v817 = vpop.f32.mrb[0].mxu0
  %v818 = vadd.f32 %v727, %v817
  %v819 = vpop.f32.mrb[0].mxu0
  %820 = vmatprep.mubr.f32.mxu0 0.0
  %821 = vmatmul.mubr.f32.gmra.mrb[0].mxu0 %v743
  %v822 = vpop.f32.mrb[0].mxu0
  %v823 = vadd.f32 %v732, %v822
  %v824 = vpop.f32.mrb[0].mxu0
  %825 = vmatprep.mubr.f32.mxu0 0.0
  %826 = vmatmul.mubr.f32.gmra.mrb[0].mxu0 %v746
  %v827 = vpop.f32.mrb[0].mxu0
  %v828 = vadd.f32 %v737, %v827
  %v829 = vpop.f32.mrb[0].mxu0
  %830 = vdwg.mxu0
  %v832 = vsel %vm126, %v715, 0
  %834 = vmatprep.subr.mxu0 0.0
  %835 = vmatpush1.msra.mxu0 %v713
  %836 = vmatprep.subr.mxu0 0.0
  %837 = vmatpush1.msra.mxu0 %v714
  %838 = vmatprep.subr.mxu0 0.0
  %839 = vmatpush1.msra.mxu0 %v832
  %840 = vmatprep.subr.mxu0 0.0
  %841 = vmatpush1.msra.mxu0 0.0
  %842 = vmatprep.subr.mxu0 0.0
  %843 = vmatpush1.msra.mxu0 0.0
  %844 = vmatprep.subr.mxu0 0.0
  %845 = vmatpush1.msra.mxu0 0.0
  %846 = vmatprep.subr.mxu0 0.0
  %847 = vmatpush1.msra.mxu0 0.0
  %848 = vmatprep.subr.mxu0 0.0
  %849 = vmatpush1.msra.mxu0 0.0
  %850 = vmatprep.subr.mxu0 0.0
  %851 = vmatpush1.msra.mxu0 0.0
  %852 = vmatprep.subr.mxu0 0.0
  %853 = vmatpush1.msra.mxu0 0.0
  %854 = vmatprep.subr.mxu0 0.0
  %855 = vmatpush1.msra.mxu0 0.0
  %856 = vmatprep.subr.mxu0 0.0
  %857 = vmatpush1.msra.mxu0 0.0
  %858 = vmatprep.subr.mxu0 0.0
  %859 = vmatpush1.msra.mxu0 0.0
  %860 = vmatprep.subr.mxu0 0.0
  %861 = vmatpush1.msra.mxu0 0.0
  %862 = vmatprep.subr.mxu0 0.0
  %863 = vmatpush1.msra.mxu0 0.0
  %864 = vmatprep.subr.mxu0 0.0
  %865 = vmatpush1.msra.mxu0 0.0
  %866 = vmatprep.subr.mxu0 0.0
  %867 = vmatpush1.msra.mxu0 0.0
  %868 = vmatprep.subr.mxu0 0.0
  %869 = vmatpush1.msra.mxu0 0.0
  %870 = vmatprep.subr.mxu0 0.0
  %871 = vmatpush1.msra.mxu0 0.0
  %872 = vmatprep.subr.mxu0 0.0
  %873 = vmatpush1.msra.mxu0 0.0
  %874 = vmatprep.subr.mxu0 0.0
  %875 = vmatpush1.msra.mxu0 0.0
  %876 = vmatprep.subr.mxu0 0.0
  %877 = vmatpush1.msra.mxu0 0.0
  %878 = vmatprep.subr.mxu0 0.0
  %879 = vmatpush1.msra.mxu0 0.0
  %880 = vmatprep.subr.mxu0 0.0
  %881 = vmatpush1.msra.mxu0 0.0
  %882 = vmatprep.subr.mxu0 0.0
  %883 = vmatpush1.msra.mxu0 0.0
  %884 = vmatprep.subr.mxu0 0.0
  %885 = vmatpush1.msra.mxu0 0.0
  %886 = vmatprep.subr.mxu0 0.0
  %887 = vmatpush1.msra.mxu0 0.0
  %888 = vmatprep.subr.mxu0 0.0
  %889 = vmatpush1.msra.mxu0 0.0
  %890 = vmatprep.subr.mxu0 0.0
  %891 = vmatpush1.msra.mxu0 0.0
  %892 = vmatprep.subr.mxu0 0.0
  %893 = vmatpush1.msra.mxu0 0.0
  %894 = vmatprep.subr.mxu0 0.0
  %895 = vmatpush1.msra.mxu0 0.0
  %896 = vmatprep.subr.mxu0 0.0
  %897 = vmatpush1.msra.mxu0 0.0
  %898 = vmatprep.mubr.f32.mxu0 0.0
  %899 = vmatmul.mubr.f32.gmra.mrb[0].mxu0 %v740
  %v900 = vpop.f32.mrb[0].mxu0
  %v901 = vadd.f32 0.0, %v900
  %v902 = vpop.f32.mrb[0].mxu0
  %903 = vmatprep.mubr.f32.mxu0 0.0
  %904 = vmatmul.mubr.f32.gmra.mrb[0].mxu0 %v743
  %v905 = vpop.f32.mrb[0].mxu0
  %v906 = vadd.f32 0.0, %v905
  %v907 = vpop.f32.mrb[0].mxu0
  %908 = vmatprep.mubr.f32.mxu0 0.0
  %909 = vmatmul.mubr.f32.gmra.mrb[0].mxu0 %v746
  %v910 = vpop.f32.mrb[0].mxu0
  %v911 = vadd.f32 0.0, %v910
  %v912 = vpop.f32.mrb[0].mxu0
  %913 = vdwg.mxu0
  %vm914 = vcmp.gt.f32.partialorder %v818, 0.0
  %vm915 = vcmp.gt.f32.partialorder %v823, 0.0
  %vm916 = vcmp.gt.f32.partialorder %v828, 0.0
  %v917 = vmax.f32 %v818, 0.0
  %v918 = vmax.f32 %v823, 0.0
  %v919 = vmax.f32 %v828, 0.0
  %v920 = vsel %vm914, %v901, 0.0
  %v921 = vsel %vm915, %v906, 0.0
  %v922 = vsel %vm916, %v911, 0.0
  %s923 = scalar_lea.vmem %s3, 96
  %v924 = vld [vmem:[%s923] sm:$0xff]
  %v925 = vld [vmem:[%s923 + $0x8] sm:$0xff]
  %v926 = vld [vmem:[%s923 + $0x10] sm:$0xf]
  %s927 = scalar_lea.vmem %s4, 96
  %v928 = vld [vmem:[%s927] sm:$0xff]
  %v929 = vld [vmem:[%s927 + $0x8] sm:$0xff]
  %v930 = vld [vmem:[%s927 + $0x10] sm:$0xf]
  %932 = vset.pattern.permute.xlu0 0
  %933 = vperm.xlu0 %932, %v928
  %v934 = vpop.permute.xlu0 %933
  %937 = vset.pattern.permute.xlu0 0
  %938 = vperm.xlu0 %937, %v929
  %v939 = vpop.permute.xlu0 %938
  %942 = vset.pattern.permute.xlu0 0
  %943 = vperm.xlu0 %942, %v930
  %v944 = vpop.permute.xlu0 %943
  %v947 = vsel %vm116, %v924, 0
  %v950 = vsel %vm116, %v925, 0
  %v953 = vsel %vm116, %v926, 0
  %v956 = vsel %vm126, %v919, 0
  %958 = vmatprep.subr.mxu0 0.0
  %959 = vmatpush1.msra.mxu0 %v917
  %960 = vmatprep.subr.mxu0 0.0
  %961 = vmatpush1.msra.mxu0 %v918
  %962 = vmatprep.subr.mxu0 0.0
  %963 = vmatpush1.msra.mxu0 %v956
  %964 = vmatprep.subr.mxu0 0.0
  %965 = vmatpush1.msra.mxu0 0.0
  %966 = vmatprep.subr.mxu0 0.0
  %967 = vmatpush1.msra.mxu0 0.0
  %968 = vmatprep.subr.mxu0 0.0
  %969 = vmatpush1.msra.mxu0 0.0
  %970 = vmatprep.subr.mxu0 0.0
  %971 = vmatpush1.msra.mxu0 0.0
  %972 = vmatprep.subr.mxu0 0.0
  %973 = vmatpush1.msra.mxu0 0.0
  %974 = vmatprep.subr.mxu0 0.0
  %975 = vmatpush1.msra.mxu0 0.0
  %976 = vmatprep.subr.mxu0 0.0
  %977 = vmatpush1.msra.mxu0 0.0
  %978 = vmatprep.subr.mxu0 0.0
  %979 = vmatpush1.msra.mxu0 0.0
  %980 = vmatprep.subr.mxu0 0.0
  %981 = vmatpush1.msra.mxu0 0.0
  %982 = vmatprep.subr.mxu0 0.0
  %983 = vmatpush1.msra.mxu0 0.0
  %984 = vmatprep.subr.mxu0 0.0
  %985 = vmatpush1.msra.mxu0 0.0
  %986 = vmatprep.subr.mxu0 0.0
  %987 = vmatpush1.msra.mxu0 0.0
  %988 = vmatprep.subr.mxu0 0.0
  %989 = vmatpush1.msra.mxu0 0.0
  %990 = vmatprep.subr.mxu0 0.0
  %991 = vmatpush1.msra.mxu0 0.0
  %992 = vmatprep.subr.mxu0 0.0
  %993 = vmatpush1.msra.mxu0 0.0
  %994 = vmatprep.subr.mxu0 0.0
  %995 = vmatpush1.msra.mxu0 0.0
  %996 = vmatprep.subr.mxu0 0.0
  %997 = vmatpush1.msra.mxu0 0.0
  %998 = vmatprep.subr.mxu0 0.0
  %999 = vmatpush1.msra.mxu0 0.0
  %1000 = vmatprep.subr.mxu0 0.0
  %1001 = vmatpush1.msra.mxu0 0.0
  %1002 = vmatprep.subr.mxu0 0.0
  %1003 = vmatpush1.msra.mxu0 0.0
  %1004 = vmatprep.subr.mxu0 0.0
  %1005 = vmatpush1.msra.mxu0 0.0
  %1006 = vmatprep.subr.mxu0 0.0
  %1007 = vmatpush1.msra.mxu0 0.0
  %1008 = vmatprep.subr.mxu0 0.0
  %1009 = vmatpush1.msra.mxu0 0.0
  %1010 = vmatprep.subr.mxu0 0.0
  %1011 = vmatpush1.msra.mxu0 0.0
  %1012 = vmatprep.subr.mxu0 0.0
  %1013 = vmatpush1.msra.mxu0 0.0
  %1014 = vmatprep.subr.mxu0 0.0
  %1015 = vmatpush1.msra.mxu0 0.0
  %1016 = vmatprep.subr.mxu0 0.0
  %1017 = vmatpush1.msra.mxu0 0.0
  %1018 = vmatprep.subr.mxu0 0.0
  %1019 = vmatpush1.msra.mxu0 0.0
  %1020 = vmatprep.subr.mxu0 0.0
  %1021 = vmatpush1.msra.mxu0 0.0
  %1022 = vmatprep.mubr.f32.mxu0 0.0
  %1023 = vmatmul.mubr.f32.gmra.mrb[0].mxu0 %v947
  %v1024 = vpop.f32.mrb[0].mxu0
  %v1025 = vadd.f32 %v934, %v1024
  %v1026 = vpop.f32.mrb[0].mxu0
  %1027 = vmatprep.mubr.f32.mxu0 0.0
  %1028 = vmatmul.mubr.f32.gmra.mrb[0].mxu0 %v950
  %v1029 = vpop.f32.mrb[0].mxu0
  %v1030 = vadd.f32 %v939, %v1029
  %v1031 = vpop.f32.mrb[0].mxu0
  %1032 = vmatprep.mubr.f32.mxu0 0.0
  %1033 = vmatmul.mubr.f32.gmra.mrb[0].mxu0 %v953
  %v1034 = vpop.f32.mrb[0].mxu0
  %v1035 = vadd.f32 %v944, %v1034
  %v1036 = vpop.f32.mrb[0].mxu0
  %1037 = vdwg.mxu0
  %v1039 = vsel %vm126, %v922, 0
  %1041 = vmatprep.subr.mxu0 0.0
  %1042 = vmatpush1.msra.mxu0 %v920
  %1043 = vmatprep.subr.mxu0 0.0
  %1044 = vmatpush1.msra.mxu0 %v921
  %1045 = vmatprep.subr.mxu0 0.0
  %1046 = vmatpush1.msra.mxu0 %v1039
  %1047 = vmatprep.subr.mxu0 0.0
  %1048 = vmatpush1.msra.mxu0 0.0
  %1049 = vmatprep.subr.mxu0 0.0
  %1050 = vmatpush1.msra.mxu0 0.0
  %1051 = vmatprep.subr.mxu0 0.0
  %1052 = vmatpush1.msra.mxu0 0.0
  %1053 = vmatprep.subr.mxu0 0.0
  %1054 = vmatpush1.msra.mxu0 0.0
  %1055 = vmatprep.subr.mxu0 0.0
  %1056 = vmatpush1.msra.mxu0 0.0
  %1057 = vmatprep.subr.mxu0 0.0
  %1058 = vmatpush1.msra.mxu0 0.0
  %1059 = vmatprep.subr.mxu0 0.0
  %1060 = vmatpush1.msra.mxu0 0.0
  %1061 = vmatprep.subr.mxu0 0.0
  %1062 = vmatpush1.msra.mxu0 0.0
  %1063 = vmatprep.subr.mxu0 0.0
  %1064 = vmatpush1.msra.mxu0 0.0
  %1065 = vmatprep.subr.mxu0 0.0
  %1066 = vmatpush1.msra.mxu0 0.0
  %1067 = vmatprep.subr.mxu0 0.0
  %1068 = vmatpush1.msra.mxu0 0.0
  %1069 = vmatprep.subr.mxu0 0.0
  %1070 = vmatpush1.msra.mxu0 0.0
  %1071 = vmatprep.subr.mxu0 0.0
  %1072 = vmatpush1.msra.mxu0 0.0
  %1073 = vmatprep.subr.mxu0 0.0
  %1074 = vmatpush1.msra.mxu0 0.0
  %1075 = vmatprep.subr.mxu0 0.0
  %1076 = vmatpush1.msra.mxu0 0.0
  %1077 = vmatprep.subr.mxu0 0.0
  %1078 = vmatpush1.msra.mxu0 0.0
  %1079 = vmatprep.subr.mxu0 0.0
  %1080 = vmatpush1.msra.mxu0 0.0
  %1081 = vmatprep.subr.mxu0 0.0
  %1082 = vmatpush1.msra.mxu0 0.0
  %1083 = vmatprep.subr.mxu0 0.0
  %1084 = vmatpush1.msra.mxu0 0.0
  %1085 = vmatprep.subr.mxu0 0.0
  %1086 = vmatpush1.msra.mxu0 0.0
  %1087 = vmatprep.subr.mxu0 0.0
  %1088 = vmatpush1.msra.mxu0 0.0
  %1089 = vmatprep.subr.mxu0 0.0
  %1090 = vmatpush1.msra.mxu0 0.0
  %1091 = vmatprep.subr.mxu0 0.0
  %1092 = vmatpush1.msra.mxu0 0.0
  %1093 = vmatprep.subr.mxu0 0.0
  %1094 = vmatpush1.msra.mxu0 0.0
  %1095 = vmatprep.subr.mxu0 0.0
  %1096 = vmatpush1.msra.mxu0 0.0
  %1097 = vmatprep.subr.mxu0 0.0
  %1098 = vmatpush1.msra.mxu0 0.0
  %1099 = vmatprep.subr.mxu0 0.0
  %1100 = vmatpush1.msra.mxu0 0.0
  %1101 = vmatprep.subr.mxu0 0.0
  %1102 = vmatpush1.msra.mxu0 0.0
  %1103 = vmatprep.subr.mxu0 0.0
  %1104 = vmatpush1.msra.mxu0 0.0
  %1105 = vmatprep.mubr.f32.mxu0 0.0
  %1106 = vmatmul.mubr.f32.gmra.mrb[0].mxu0 %v947
  %v1107 = vpop.f32.mrb[0].mxu0
  %v1108 = vadd.f32 0.0, %v1107
  %v1109 = vpop.f32.mrb[0].mxu0
  %1110 = vmatprep.mubr.f32.mxu0 0.0
  %1111 = vmatmul.mubr.f32.gmra.mrb[0].mxu0 %v950
  %v1112 = vpop.f32.mrb[0].mxu0
  %v1113 = vadd.f32 0.0, %v1112
  %v1114 = vpop.f32.mrb[0].mxu0
  %1115 = vmatprep.mubr.f32.mxu0 0.0
  %1116 = vmatmul.mubr.f32.gmra.mrb[0].mxu0 %v953
  %v1117 = vpop.f32.mrb[0].mxu0
  %v1118 = vadd.f32 0.0, %v1117
  %v1119 = vpop.f32.mrb[0].mxu0
  %1120 = vdwg.mxu0
  %vm1121 = vcmp.gt.f32.partialorder %v1025, 0.0
  %vm1122 = vcmp.gt.f32.partialorder %v1030, 0.0
  %vm1123 = vcmp.gt.f32.partialorder %v1035, 0.0
  %v1124 = vmax.f32 %v1025, 0.0
  %v1125 = vmax.f32 %v1030, 0.0
  %v1126 = vmax.f32 %v1035, 0.0
  %v1127 = vsel %vm1121, %v1108, 0.0
  %v1128 = vsel %vm1122, %v1113, 0.0
  %v1129 = vsel %vm1123, %v1118, 0.0
  %s1130 = scalar_lea.vmem %s3, 120
  %v1131 = vld [vmem:[%s1130] sm:$0xff]
  %v1132 = vld [vmem:[%s1130 + $0x8] sm:$0xff]
  %v1133 = vld [vmem:[%s1130 + $0x10] sm:$0xf]
  %s1134 = scalar_lea.vmem %s4, 120
  %v1135 = vld [vmem:[%s1134] sm:$0xff]
  %v1136 = vld [vmem:[%s1134 + $0x8] sm:$0xff]
  %v1137 = vld [vmem:[%s1134 + $0x10] sm:$0xf]
  %1139 = vset.pattern.permute.xlu0 0
  %1140 = vperm.xlu0 %1139, %v1135
  %v1141 = vpop.permute.xlu0 %1140
  %1144 = vset.pattern.permute.xlu0 0
  %1145 = vperm.xlu0 %1144, %v1136
  %v1146 = vpop.permute.xlu0 %1145
  %1149 = vset.pattern.permute.xlu0 0
  %1150 = vperm.xlu0 %1149, %v1137
  %v1151 = vpop.permute.xlu0 %1150
  %v1154 = vsel %vm116, %v1131, 0
  %v1157 = vsel %vm116, %v1132, 0
  %v1160 = vsel %vm116, %v1133, 0
  %v1163 = vsel %vm126, %v1126, 0
  %1165 = vmatprep.subr.mxu0 0.0
  %1166 = vmatpush1.msra.mxu0 %v1124
  %1167 = vmatprep.subr.mxu0 0.0
  %1168 = vmatpush1.msra.mxu0 %v1125
  %1169 = vmatprep.subr.mxu0 0.0
  %1170 = vmatpush1.msra.mxu0 %v1163
  %1171 = vmatprep.subr.mxu0 0.0
  %1172 = vmatpush1.msra.mxu0 0.0
  %1173 = vmatprep.subr.mxu0 0.0
  %1174 = vmatpush1.msra.mxu0 0.0
  %1175 = vmatprep.subr.mxu0 0.0
  %1176 = vmatpush1.msra.mxu0 0.0
  %1177 = vmatprep.subr.mxu0 0.0
  %1178 = vmatpush1.msra.mxu0 0.0
  %1179 = vmatprep.subr.mxu0 0.0
  %1180 = vmatpush1.msra.mxu0 0.0
  %1181 = vmatprep.subr.mxu0 0.0
  %1182 = vmatpush1.msra.mxu0 0.0
  %1183 = vmatprep.subr.mxu0 0.0
  %1184 = vmatpush1.msra.mxu0 0.0
  %1185 = vmatprep.subr.mxu0 0.0
  %1186 = vmatpush1.msra.mxu0 0.0
  %1187 = vmatprep.subr.mxu0 0.0
  %1188 = vmatpush1.msra.mxu0 0.0
  %1189 = vmatprep.subr.mxu0 0.0
  %1190 = vmatpush1.msra.mxu0 0.0
  %1191 = vmatprep.subr.mxu0 0.0
  %1192 = vmatpush1.msra.mxu0 0.0
  %1193 = vmatprep.subr.mxu0 0.0
  %1194 = vmatpush1.msra.mxu0 0.0
  %1195 = vmatprep.subr.mxu0 0.0
  %1196 = vmatpush1.msra.mxu0 0.0
  %1197 = vmatprep.subr.mxu0 0.0
  %1198 = vmatpush1.msra.mxu0 0.0
  %1199 = vmatprep.subr.mxu0 0.0
  %1200 = vmatpush1.msra.mxu0 0.0
  %1201 = vmatprep.subr.mxu0 0.0
  %1202 = vmatpush1.msra.mxu0 0.0
  %1203 = vmatprep.subr.mxu0 0.0
  %1204 = vmatpush1.msra.mxu0 0.0
  %1205 = vmatprep.subr.mxu0 0.0
  %1206 = vmatpush1.msra.mxu0 0.0
  %1207 = vmatprep.subr.mxu0 0.0
  %1208 = vmatpush1.msra.mxu0 0.0
  %1209 = vmatprep.subr.mxu0 0.0
  %1210 = vmatpush1.msra.mxu0 0.0
  %1211 = vmatprep.subr.mxu0 0.0
  %1212 = vmatpush1.msra.mxu0 0.0
  %1213 = vmatprep.subr.mxu0 0.0
  %1214 = vmatpush1.msra.mxu0 0.0
  %1215 = vmatprep.subr.mxu0 0.0
  %1216 = vmatpush1.msra.mxu0 0.0
  %1217 = vmatprep.subr.mxu0 0.0
  %1218 = vmatpush1.msra.mxu0 0.0
  %1219 = vmatprep.subr.mxu0 0.0
  %1220 = vmatpush1.msra.mxu0 0.0
  %1221 = vmatprep.subr.mxu0 0.0
  %1222 = vmatpush1.msra.mxu0 0.0
  %1223 = vmatprep.subr.mxu0 0.0
  %1224 = vmatpush1.msra.mxu0 0.0
  %1225 = vmatprep.subr.mxu0 0.0
  %1226 = vmatpush1.msra.mxu0 0.0
  %1227 = vmatprep.subr.mxu0 0.0
  %1228 = vmatpush1.msra.mxu0 0.0
  %1229 = vmatprep.mubr.f32.mxu0 0.0
  %1230 = vmatmul.mubr.f32.gmra.mrb[0].mxu0 %v1154
  %v1231 = vpop.f32.mrb[0].mxu0
  %v1232 = vadd.f32 %v1141, %v1231
  %v1233 = vpop.f32.mrb[0].mxu0
  %1234 = vmatprep.mubr.f32.mxu0 0.0
  %1235 = vmatmul.mubr.f32.gmra.mrb[0].mxu0 %v1157
  %v1236 = vpop.f32.mrb[0].mxu0
  %v1237 = vadd.f32 %v1146, %v1236
  %v1238 = vpop.f32.mrb[0].mxu0
  %1239 = vmatprep.mubr.f32.mxu0 0.0
  %1240 = vmatmul.mubr.f32.gmra.mrb[0].mxu0 %v1160
  %v1241 = vpop.f32.mrb[0].mxu0
  %v1242 = vadd.f32 %v1151, %v1241
  %v1243 = vpop.f32.mrb[0].mxu0
  %1244 = vdwg.mxu0
  %v1246 = vsel %vm126, %v1129, 0
  %1248 = vmatprep.subr.mxu0 0.0
  %1249 = vmatpush1.msra.mxu0 %v1127
  %1250 = vmatprep.subr.mxu0 0.0
  %1251 = vmatpush1.msra.mxu0 %v1128
  %1252 = vmatprep.subr.mxu0 0.0
  %1253 = vmatpush1.msra.mxu0 %v1246
  %1254 = vmatprep.subr.mxu0 0.0
  %1255 = vmatpush1.msra.mxu0 0.0
  %1256 = vmatprep.subr.mxu0 0.0
  %1257 = vmatpush1.msra.mxu0 0.0
  %1258 = vmatprep.subr.mxu0 0.0
  %1259 = vmatpush1.msra.mxu0 0.0
  %1260 = vmatprep.subr.mxu0 0.0
  %1261 = vmatpush1.msra.mxu0 0.0
  %1262 = vmatprep.subr.mxu0 0.0
  %1263 = vmatpush1.msra.mxu0 0.0
  %1264 = vmatprep.subr.mxu0 0.0
  %1265 = vmatpush1.msra.mxu0 0.0
  %1266 = vmatprep.subr.mxu0 0.0
  %1267 = vmatpush1.msra.mxu0 0.0
  %1268 = vmatprep.subr.mxu0 0.0
  %1269 = vmatpush1.msra.mxu0 0.0
  %1270 = vmatprep.subr.mxu0 0.0
  %1271 = vmatpush1.msra.mxu0 0.0
  %1272 = vmatprep.subr.mxu0 0.0
  %1273 = vmatpush1.msra.mxu0 0.0
  %1274 = vmatprep.subr.mxu0 0.0
  %1275 = vmatpush1.msra.mxu0 0.0
  %1276 = vmatprep.subr.mxu0 0.0
  %1277 = vmatpush1.msra.mxu0 0.0
  %1278 = vmatprep.subr.mxu0 0.0
  %1279 = vmatpush1.msra.mxu0 0.0
  %1280 = vmatprep.subr.mxu0 0.0
  %1281 = vmatpush1.msra.mxu0 0.0
  %1282 = vmatprep.subr.mxu0 0.0
  %1283 = vmatpush1.msra.mxu0 0.0
  %1284 = vmatprep.subr.mxu0 0.0
  %1285 = vmatpush1.msra.mxu0 0.0
  %1286 = vmatprep.subr.mxu0 0.0
  %1287 = vmatpush1.msra.mxu0 0.0
  %1288 = vmatprep.subr.mxu0 0.0
  %1289 = vmatpush1.msra.mxu0 0.0
  %1290 = vmatprep.subr.mxu0 0.0
  %1291 = vmatpush1.msra.mxu0 0.0
  %1292 = vmatprep.subr.mxu0 0.0
  %1293 = vmatpush1.msra.mxu0 0.0
  %1294 = vmatprep.subr.mxu0 0.0
  %1295 = vmatpush1.msra.mxu0 0.0
  %1296 = vmatprep.subr.mxu0 0.0
  %1297 = vmatpush1.msra.mxu0 0.0
  %1298 = vmatprep.subr.mxu0 0.0
  %1299 = vmatpush1.msra.mxu0 0.0
  %1300 = vmatprep.subr.mxu0 0.0
  %1301 = vmatpush1.msra.mxu0 0.0
  %1302 = vmatprep.subr.mxu0 0.0
  %1303 = vmatpush1.msra.mxu0 0.0
  %1304 = vmatprep.subr.mxu0 0.0
  %1305 = vmatpush1.msra.mxu0 0.0
  %1306 = vmatprep.subr.mxu0 0.0
  %1307 = vmatpush1.msra.mxu0 0.0
  %1308 = vmatprep.subr.mxu0 0.0
  %1309 = vmatpush1.msra.mxu0 0.0
  %1310 = vmatprep.subr.mxu0 0.0
  %1311 = vmatpush1.msra.mxu0 0.0
  %1312 = vmatprep.mubr.f32.mxu0 0.0
  %1313 = vmatmul.mubr.f32.gmra.mrb[0].mxu0 %v1154
  %v1314 = vpop.f32.mrb[0].mxu0
  %v1315 = vadd.f32 0.0, %v1314
  %v1316 = vpop.f32.mrb[0].mxu0
  %1317 = vmatprep.mubr.f32.mxu0 0.0
  %1318 = vmatmul.mubr.f32.gmra.mrb[0].mxu0 %v1157
  %v1319 = vpop.f32.mrb[0].mxu0
  %v1320 = vadd.f32 0.0, %v1319
  %v1321 = vpop.f32.mrb[0].mxu0
  %1322 = vmatprep.mubr.f32.mxu0 0.0
  %1323 = vmatmul.mubr.f32.gmra.mrb[0].mxu0 %v1160
  %v1324 = vpop.f32.mrb[0].mxu0
  %v1325 = vadd.f32 0.0, %v1324
  %v1326 = vpop.f32.mrb[0].mxu0
  %1327 = vdwg.mxu0
  %vm1328 = vcmp.gt.f32.partialorder %v1232, 0.0
  %vm1329 = vcmp.gt.f32.partialorder %v1237, 0.0
  %vm1330 = vcmp.gt.f32.partialorder %v1242, 0.0
  %v1331 = vmax.f32 %v1232, 0.0
  %v1332 = vmax.f32 %v1237, 0.0
  %v1333 = vmax.f32 %v1242, 0.0
  %v1334 = vsel %vm1328, %v1315, 0.0
  %v1335 = vsel %vm1329, %v1320, 0.0
  %v1336 = vsel %vm1330, %v1325, 0.0
  %s1337 = scalar_lea.vmem %s3, 144
  %v1338 = vld [vmem:[%s1337] sm:$0xff]
  %v1339 = vld [vmem:[%s1337 + $0x8] sm:$0xff]
  %v1340 = vld [vmem:[%s1337 + $0x10] sm:$0xf]
  %s1341 = scalar_lea.vmem %s4, 144
  %v1342 = vld [vmem:[%s1341] sm:$0xff]
  %v1343 = vld [vmem:[%s1341 + $0x8] sm:$0xff]
  %v1344 = vld [vmem:[%s1341 + $0x10] sm:$0xf]
  %1346 = vset.pattern.permute.xlu0 0
  %1347 = vperm.xlu0 %1346, %v1342
  %v1348 = vpop.permute.xlu0 %1347
  %1351 = vset.pattern.permute.xlu0 0
  %1352 = vperm.xlu0 %1351, %v1343
  %v1353 = vpop.permute.xlu0 %1352
  %1356 = vset.pattern.permute.xlu0 0
  %1357 = vperm.xlu0 %1356, %v1344
  %v1358 = vpop.permute.xlu0 %1357
  %v1361 = vsel %vm116, %v1338, 0
  %v1364 = vsel %vm116, %v1339, 0
  %v1367 = vsel %vm116, %v1340, 0
  %v1370 = vsel %vm126, %v1333, 0
  %1372 = vmatprep.subr.mxu0 0.0
  %1373 = vmatpush1.msra.mxu0 %v1331
  %1374 = vmatprep.subr.mxu0 0.0
  %1375 = vmatpush1.msra.mxu0 %v1332
  %1376 = vmatprep.subr.mxu0 0.0
  %1377 = vmatpush1.msra.mxu0 %v1370
  %1378 = vmatprep.subr.mxu0 0.0
  %1379 = vmatpush1.msra.mxu0 0.0
  %1380 = vmatprep.subr.mxu0 0.0
  %1381 = vmatpush1.msra.mxu0 0.0
  %1382 = vmatprep.subr.mxu0 0.0
  %1383 = vmatpush1.msra.mxu0 0.0
  %1384 = vmatprep.subr.mxu0 0.0
  %1385 = vmatpush1.msra.mxu0 0.0
  %1386 = vmatprep.subr.mxu0 0.0
  %1387 = vmatpush1.msra.mxu0 0.0
  %1388 = vmatprep.subr.mxu0 0.0
  %1389 = vmatpush1.msra.mxu0 0.0
  %1390 = vmatprep.subr.mxu0 0.0
  %1391 = vmatpush1.msra.mxu0 0.0
  %1392 = vmatprep.subr.mxu0 0.0
  %1393 = vmatpush1.msra.mxu0 0.0
  %1394 = vmatprep.subr.mxu0 0.0
  %1395 = vmatpush1.msra.mxu0 0.0
  %1396 = vmatprep.subr.mxu0 0.0
  %1397 = vmatpush1.msra.mxu0 0.0
  %1398 = vmatprep.subr.mxu0 0.0
  %1399 = vmatpush1.msra.mxu0 0.0
  %1400 = vmatprep.subr.mxu0 0.0
  %1401 = vmatpush1.msra.mxu0 0.0
  %1402 = vmatprep.subr.mxu0 0.0
  %1403 = vmatpush1.msra.mxu0 0.0
  %1404 = vmatprep.subr.mxu0 0.0
  %1405 = vmatpush1.msra.mxu0 0.0
  %1406 = vmatprep.subr.mxu0 0.0
  %1407 = vmatpush1.msra.mxu0 0.0
  %1408 = vmatprep.subr.mxu0 0.0
  %1409 = vmatpush1.msra.mxu0 0.0
  %1410 = vmatprep.subr.mxu0 0.0
  %1411 = vmatpush1.msra.mxu0 0.0
  %1412 = vmatprep.subr.mxu0 0.0
  %1413 = vmatpush1.msra.mxu0 0.0
  %1414 = vmatprep.subr.mxu0 0.0
  %1415 = vmatpush1.msra.mxu0 0.0
  %1416 = vmatprep.subr.mxu0 0.0
  %1417 = vmatpush1.msra.mxu0 0.0
  %1418 = vmatprep.subr.mxu0 0.0
  %1419 = vmatpush1.msra.mxu0 0.0
  %1420 = vmatprep.subr.mxu0 0.0
  %1421 = vmatpush1.msra.mxu0 0.0
  %1422 = vmatprep.subr.mxu0 0.0
  %1423 = vmatpush1.msra.mxu0 0.0
  %1424 = vmatprep.subr.mxu0 0.0
  %1425 = vmatpush1.msra.mxu0 0.0
  %1426 = vmatprep.subr.mxu0 0.0
  %1427 = vmatpush1.msra.mxu0 0.0
  %1428 = vmatprep.subr.mxu0 0.0
  %1429 = vmatpush1.msra.mxu0 0.0
  %1430 = vmatprep.subr.mxu0 0.0
  %1431 = vmatpush1.msra.mxu0 0.0
  %1432 = vmatprep.subr.mxu0 0.0
  %1433 = vmatpush1.msra.mxu0 0.0
  %1434 = vmatprep.subr.mxu0 0.0
  %1435 = vmatpush1.msra.mxu0 0.0
  %1436 = vmatprep.mubr.f32.mxu0 0.0
  %1437 = vmatmul.mubr.f32.gmra.mrb[0].mxu0 %v1361
  %v1438 = vpop.f32.mrb[0].mxu0
  %v1439 = vadd.f32 %v1348, %v1438
  %v1440 = vpop.f32.mrb[0].mxu0
  %1441 = vmatprep.mubr.f32.mxu0 0.0
  %1442 = vmatmul.mubr.f32.gmra.mrb[0].mxu0 %v1364
  %v1443 = vpop.f32.mrb[0].mxu0
  %v1444 = vadd.f32 %v1353, %v1443
  %v1445 = vpop.f32.mrb[0].mxu0
  %1446 = vmatprep.mubr.f32.mxu0 0.0
  %1447 = vmatmul.mubr.f32.gmra.mrb[0].mxu0 %v1367
  %v1448 = vpop.f32.mrb[0].mxu0
  %v1449 = vadd.f32 %v1358, %v1448
  %v1450 = vpop.f32.mrb[0].mxu0
  %1451 = vdwg.mxu0
  %v1453 = vsel %vm126, %v1336, 0
  %1455 = vmatprep.subr.mxu0 0.0
  %1456 = vmatpush1.msra.mxu0 %v1334
  %1457 = vmatprep.subr.mxu0 0.0
  %1458 = vmatpush1.msra.mxu0 %v1335
  %1459 = vmatprep.subr.mxu0 0.0
  %1460 = vmatpush1.msra.mxu0 %v1453
  %1461 = vmatprep.subr.mxu0 0.0
  %1462 = vmatpush1.msra.mxu0 0.0
  %1463 = vmatprep.subr.mxu0 0.0
  %1464 = vmatpush1.msra.mxu0 0.0
  %1465 = vmatprep.subr.mxu0 0.0
  %1466 = vmatpush1.msra.mxu0 0.0
  %1467 = vmatprep.subr.mxu0 0.0
  %1468 = vmatpush1.msra.mxu0 0.0
  %1469 = vmatprep.subr.mxu0 0.0
  %1470 = vmatpush1.msra.mxu0 0.0
  %1471 = vmatprep.subr.mxu0 0.0
  %1472 = vmatpush1.msra.mxu0 0.0
  %1473 = vmatprep.subr.mxu0 0.0
  %1474 = vmatpush1.msra.mxu0 0.0
  %1475 = vmatprep.subr.mxu0 0.0
  %1476 = vmatpush1.msra.mxu0 0.0
  %1477 = vmatprep.subr.mxu0 0.0
  %1478 = vmatpush1.msra.mxu0 0.0
  %1479 = vmatprep.subr.mxu0 0.0
  %1480 = vmatpush1.msra.mxu0 0.0
  %1481 = vmatprep.subr.mxu0 0.0
  %1482 = vmatpush1.msra.mxu0 0.0
  %1483 = vmatprep.subr.mxu0 0.0
  %1484 = vmatpush1.msra.mxu0 0.0
  %1485 = vmatprep.subr.mxu0 0.0
  %1486 = vmatpush1.msra.mxu0 0.0
  %1487 = vmatprep.subr.mxu0 0.0
  %1488 = vmatpush1.msra.mxu0 0.0
  %1489 = vmatprep.subr.mxu0 0.0
  %1490 = vmatpush1.msra.mxu0 0.0
  %1491 = vmatprep.subr.mxu0 0.0
  %1492 = vmatpush1.msra.mxu0 0.0
  %1493 = vmatprep.subr.mxu0 0.0
  %1494 = vmatpush1.msra.mxu0 0.0
  %1495 = vmatprep.subr.mxu0 0.0
  %1496 = vmatpush1.msra.mxu0 0.0
  %1497 = vmatprep.subr.mxu0 0.0
  %1498 = vmatpush1.msra.mxu0 0.0
  %1499 = vmatprep.subr.mxu0 0.0
  %1500 = vmatpush1.msra.mxu0 0.0
  %1501 = vmatprep.subr.mxu0 0.0
  %1502 = vmatpush1.msra.mxu0 0.0
  %1503 = vmatprep.subr.mxu0 0.0
  %1504 = vmatpush1.msra.mxu0 0.0
  %1505 = vmatprep.subr.mxu0 0.0
  %1506 = vmatpush1.msra.mxu0 0.0
  %1507 = vmatprep.subr.mxu0 0.0
  %1508 = vmatpush1.msra.mxu0 0.0
  %1509 = vmatprep.subr.mxu0 0.0
  %1510 = vmatpush1.msra.mxu0 0.0
  %1511 = vmatprep.subr.mxu0 0.0
  %1512 = vmatpush1.msra.mxu0 0.0
  %1513 = vmatprep.subr.mxu0 0.0
  %1514 = vmatpush1.msra.mxu0 0.0
  %1515 = vmatprep.subr.mxu0 0.0
  %1516 = vmatpush1.msra.mxu0 0.0
  %1517 = vmatprep.subr.mxu0 0.0
  %1518 = vmatpush1.msra.mxu0 0.0
  %1519 = vmatprep.mubr.f32.mxu0 0.0
  %1520 = vmatmul.mubr.f32.gmra.mrb[0].mxu0 %v1361
  %v1521 = vpop.f32.mrb[0].mxu0
  %v1522 = vadd.f32 0.0, %v1521
  %v1523 = vpop.f32.mrb[0].mxu0
  %1524 = vmatprep.mubr.f32.mxu0 0.0
  %1525 = vmatmul.mubr.f32.gmra.mrb[0].mxu0 %v1364
  %v1526 = vpop.f32.mrb[0].mxu0
  %v1527 = vadd.f32 0.0, %v1526
  %v1528 = vpop.f32.mrb[0].mxu0
  %1529 = vmatprep.mubr.f32.mxu0 0.0
  %1530 = vmatmul.mubr.f32.gmra.mrb[0].mxu0 %v1367
  %v1531 = vpop.f32.mrb[0].mxu0
  %v1532 = vadd.f32 0.0, %v1531
  %v1533 = vpop.f32.mrb[0].mxu0
  %1534 = vdwg.mxu0
  %vm1535 = vcmp.gt.f32.partialorder %v1439, 0.0
  %vm1536 = vcmp.gt.f32.partialorder %v1444, 0.0
  %vm1537 = vcmp.gt.f32.partialorder %v1449, 0.0
  %v1538 = vmax.f32 %v1439, 0.0
  %v1539 = vmax.f32 %v1444, 0.0
  %v1540 = vmax.f32 %v1449, 0.0
  %v1541 = vsel %vm1535, %v1522, 0.0
  %v1542 = vsel %vm1536, %v1527, 0.0
  %v1543 = vsel %vm1537, %v1532, 0.0
  %v1544 = vld [vmem:[%s5] sm:$0xff]
  %v1545 = vld [vmem:[%s6] sm:$0xff]
  %1547 = vset.pattern.permute.xlu0 0
  %1548 = vperm.xlu0 %1547, %v1545
  %v1549 = vpop.permute.xlu0 %1548
  %v1552 = vsel %vm116, %v1544, 0
  %v1555 = vsel %vm126, %v1540, 0
  %1557 = vmatprep.subr.mxu0 0.0
  %1558 = vmatpush1.msra.mxu0 %v1538
  %1559 = vmatprep.subr.mxu0 0.0
  %1560 = vmatpush1.msra.mxu0 %v1539
  %1561 = vmatprep.subr.mxu0 0.0
  %1562 = vmatpush1.msra.mxu0 %v1555
  %1563 = vmatprep.subr.mxu0 0.0
  %1564 = vmatpush1.msra.mxu0 0.0
  %1565 = vmatprep.subr.mxu0 0.0
  %1566 = vmatpush1.msra.mxu0 0.0
  %1567 = vmatprep.subr.mxu0 0.0
  %1568 = vmatpush1.msra.mxu0 0.0
  %1569 = vmatprep.subr.mxu0 0.0
  %1570 = vmatpush1.msra.mxu0 0.0
  %1571 = vmatprep.subr.mxu0 0.0
  %1572 = vmatpush1.msra.mxu0 0.0
  %1573 = vmatprep.subr.mxu0 0.0
  %1574 = vmatpush1.msra.mxu0 0.0
  %1575 = vmatprep.subr.mxu0 0.0
  %1576 = vmatpush1.msra.mxu0 0.0
  %1577 = vmatprep.subr.mxu0 0.0
  %1578 = vmatpush1.msra.mxu0 0.0
  %1579 = vmatprep.subr.mxu0 0.0
  %1580 = vmatpush1.msra.mxu0 0.0
  %1581 = vmatprep.subr.mxu0 0.0
  %1582 = vmatpush1.msra.mxu0 0.0
  %1583 = vmatprep.subr.mxu0 0.0
  %1584 = vmatpush1.msra.mxu0 0.0
  %1585 = vmatprep.subr.mxu0 0.0
  %1586 = vmatpush1.msra.mxu0 0.0
  %1587 = vmatprep.subr.mxu0 0.0
  %1588 = vmatpush1.msra.mxu0 0.0
  %1589 = vmatprep.subr.mxu0 0.0
  %1590 = vmatpush1.msra.mxu0 0.0
  %1591 = vmatprep.subr.mxu0 0.0
  %1592 = vmatpush1.msra.mxu0 0.0
  %1593 = vmatprep.subr.mxu0 0.0
  %1594 = vmatpush1.msra.mxu0 0.0
  %1595 = vmatprep.subr.mxu0 0.0
  %1596 = vmatpush1.msra.mxu0 0.0
  %1597 = vmatprep.subr.mxu0 0.0
  %1598 = vmatpush1.msra.mxu0 0.0
  %1599 = vmatprep.subr.mxu0 0.0
  %1600 = vmatpush1.msra.mxu0 0.0
  %1601 = vmatprep.subr.mxu0 0.0
  %1602 = vmatpush1.msra.mxu0 0.0
  %1603 = vmatprep.subr.mxu0 0.0
  %1604 = vmatpush1.msra.mxu0 0.0
  %1605 = vmatprep.subr.mxu0 0.0
  %1606 = vmatpush1.msra.mxu0 0.0
  %1607 = vmatprep.subr.mxu0 0.0
  %1608 = vmatpush1.msra.mxu0 0.0
  %1609 = vmatprep.subr.mxu0 0.0
  %1610 = vmatpush1.msra.mxu0 0.0
  %1611 = vmatprep.subr.mxu0 0.0
  %1612 = vmatpush1.msra.mxu0 0.0
  %1613 = vmatprep.subr.mxu0 0.0
  %1614 = vmatpush1.msra.mxu0 0.0
  %1615 = vmatprep.subr.mxu0 0.0
  %1616 = vmatpush1.msra.mxu0 0.0
  %1617 = vmatprep.subr.mxu0 0.0
  %1618 = vmatpush1.msra.mxu0 0.0
  %1619 = vmatprep.subr.mxu0 0.0
  %1620 = vmatpush1.msra.mxu0 0.0
  %1621 = vmatprep.mubr.f32.mxu0 0.0
  %1622 = vmatmul.mubr.f32.gmra.mrb[0].mxu0 %v1552
  %v1623 = vpop.f32.mrb[0].mxu0
  %v1624 = vadd.f32 %v1549, %v1623
  %v1625 = vpop.f32.mrb[0].mxu0
  %1626 = vdwg.mxu0
  %v1628 = vsel %vm126, %v1543, 0
  %1630 = vmatprep.subr.mxu0 0.0
  %1631 = vmatpush1.msra.mxu0 %v1541
  %1632 = vmatprep.subr.mxu0 0.0
  %1633 = vmatpush1.msra.mxu0 %v1542
  %1634 = vmatprep.subr.mxu0 0.0
  %1635 = vmatpush1.msra.mxu0 %v1628
  %1636 = vmatprep.subr.mxu0 0.0
  %1637 = vmatpush1.msra.mxu0 0.0
  %1638 = vmatprep.subr.mxu0 0.0
  %1639 = vmatpush1.msra.mxu0 0.0
  %1640 = vmatprep.subr.mxu0 0.0
  %1641 = vmatpush1.msra.mxu0 0.0
  %1642 = vmatprep.subr.mxu0 0.0
  %1643 = vmatpush1.msra.mxu0 0.0
  %1644 = vmatprep.subr.mxu0 0.0
  %1645 = vmatpush1.msra.mxu0 0.0
  %1646 = vmatprep.subr.mxu0 0.0
  %1647 = vmatpush1.msra.mxu0 0.0
  %1648 = vmatprep.subr.mxu0 0.0
  %1649 = vmatpush1.msra.mxu0 0.0
  %1650 = vmatprep.subr.mxu0 0.0
  %1651 = vmatpush1.msra.mxu0 0.0
  %1652 = vmatprep.subr.mxu0 0.0
  %1653 = vmatpush1.msra.mxu0 0.0
  %1654 = vmatprep.subr.mxu0 0.0
  %1655 = vmatpush1.msra.mxu0 0.0
  %1656 = vmatprep.subr.mxu0 0.0
  %1657 = vmatpush1.msra.mxu0 0.0
  %1658 = vmatprep.subr.mxu0 0.0
  %1659 = vmatpush1.msra.mxu0 0.0
  %1660 = vmatprep.subr.mxu0 0.0
  %1661 = vmatpush1.msra.mxu0 0.0
  %1662 = vmatprep.subr.mxu0 0.0
  %1663 = vmatpush1.msra.mxu0 0.0
  %1664 = vmatprep.subr.mxu0 0.0
  %1665 = vmatpush1.msra.mxu0 0.0
  %1666 = vmatprep.subr.mxu0 0.0
  %1667 = vmatpush1.msra.mxu0 0.0
  %1668 = vmatprep.subr.mxu0 0.0
  %1669 = vmatpush1.msra.mxu0 0.0
  %1670 = vmatprep.subr.mxu0 0.0
  %1671 = vmatpush1.msra.mxu0 0.0
  %1672 = vmatprep.subr.mxu0 0.0
  %1673 = vmatpush1.msra.mxu0 0.0
  %1674 = vmatprep.subr.mxu0 0.0
  %1675 = vmatpush1.msra.mxu0 0.0
  %1676 = vmatprep.subr.mxu0 0.0
  %1677 = vmatpush1.msra.mxu0 0.0
  %1678 = vmatprep.subr.mxu0 0.0
  %1679 = vmatpush1.msra.mxu0 0.0
  %1680 = vmatprep.subr.mxu0 0.0
  %1681 = vmatpush1.msra.mxu0 0.0
  %1682 = vmatprep.subr.mxu0 0.0
  %1683 = vmatpush1.msra.mxu0 0.0
  %1684 = vmatprep.subr.mxu0 0.0
  %1685 = vmatpush1.msra.mxu0 0.0
  %1686 = vmatprep.subr.mxu0 0.0
  %1687 = vmatpush1.msra.mxu0 0.0
  %1688 = vmatprep.subr.mxu0 0.0
  %1689 = vmatpush1.msra.mxu0 0.0
  %1690 = vmatprep.subr.mxu0 0.0
  %1691 = vmatpush1.msra.mxu0 0.0
  %1692 = vmatprep.subr.mxu0 0.0
  %1693 = vmatpush1.msra.mxu0 0.0
  %1694 = vmatprep.mubr.f32.mxu0 0.0
  %1695 = vmatmul.mubr.f32.gmra.mrb[0].mxu0 %v1552
  %v1696 = vpop.f32.mrb[0].mxu0
  %v1697 = vadd.f32 0.0, %v1696
  %v1698 = vpop.f32.mrb[0].mxu0
  %1699 = vdwg.mxu0
  %1700 = vst [vmem:[%s10] sm:$0xff] %v1624
  %v1701 = vld [vmem:[%s7] sm:$0xff]
  %v1702 = vld [vmem:[%s8] sm:$0xff]
  %1704 = vset.pattern.permute.xlu0 0
  %1705 = vperm.xlu0 %1704, %v1702
  %v1706 = vpop.permute.xlu0 %1705
  %v1708 = vmul.f32 %v1706, %v1624
  %1710 = vset.pattern.permute.xlu0 0
  %1711 = vperm.xlu0 %1710, %v1701
  %v1712 = vpop.permute.xlu0 %1711
  %v1714 = vadd.f32 %v1712, %v1708
  %v1716 = vrot.slane %v1714, 1
  %v1718 = vmul.f32 %v1714, %v1716
  %v1719 = vld [vmem:[%s9] sm:$0xff]
  %1721 = vset.pattern.permute.xlu0 0
  %1722 = vperm.xlu0 %1721, %v1719
  %v1723 = vpop.permute.xlu0 %1722
  %v1725 = vlaneseq
  %v1726 = vshrl.u32 %v1725, 7
  %v1727 = vsub.s32 0, %v1726
  %v1728 = vrot.slane %v1714, %v1727
  %v1729 = vmul.f32 %v1723, %v1728
  %s1730 = scalar_lea.vmem %s9, 8
  %v1731 = vld [vmem:[%s1730] sm:$0xff]
  %1733 = vset.pattern.permute.xlu0 0
  %1734 = vperm.xlu0 %1733, %v1731
  %v1735 = vpop.permute.xlu0 %1734
  %v1737 = vlaneseq
  %v1738 = vshrl.u32 %v1737, 7
  %v1739 = vsub.s32 1, %v1738
  %v1740 = vrot.slane %v1714, %v1739
  %v1741 = vmul.f32 %v1735, %v1740
  %v1742 = vadd.f32 %v1729, %v1741
  %s1743 = scalar_lea.vmem %s9, 16
  %v1744 = vld [vmem:[%s1743] sm:$0xff]
  %1746 = vset.pattern.permute.xlu0 0
  %1747 = vperm.xlu0 %1746, %v1744
  %v1748 = vpop.permute.xlu0 %1747
  %v1750 = vlaneseq
  %v1751 = vshrl.u32 %v1750, 7
  %v1752 = vsub.s32 2, %v1751
  %v1753 = vrot.slane %v1714, %v1752
  %v1754 = vmul.f32 %v1748, %v1753
  %v1755 = vadd.f32 %v1742, %v1754
  %s1756 = scalar_lea.vmem %s9, 24
  %v1757 = vld [vmem:[%s1756] sm:$0xff]
  %1759 = vset.pattern.permute.xlu0 0
  %1760 = vperm.xlu0 %1759, %v1757
  %v1761 = vpop.permute.xlu0 %1760
  %v1763 = vlaneseq
  %v1764 = vshrl.u32 %v1763, 7
  %v1765 = vsub.s32 0, %v1764
  %v1766 = vrot.slane %v1718, %v1765
  %v1767 = vmul.f32 %v1761, %v1766
  %v1768 = vadd.f32 %v1755, %v1767
  %v1769 = vsub.f32 %v1697, %v1768
  %1770 = vst [vmem:[%s11] sm:$0xff] %v1769
  // Predicated region
  $region42: #{pinn_net_f.1} parent=0 // pred_check
    _
  $region43: #{pinn_net_f.1} parent=0 // pred_check_branch
    %1772 = sbr.rel (0) target = $region45
  $region44: #{pinn_net_f.1} parent=0 // pred_region
    _
  $region45: #{pinn_net_f.1} parent=0 // pred_fallthru
    _
  // Predicated region
  $region46: #{pinn_net_f.1} parent=0 // pred_check
    _
  $region47: #{pinn_net_f.1} parent=0 // pred_check_branch
    %1774 = sbr.rel (0) target = $region49
  $region48: #{pinn_net_f.1} parent=0 // pred_region
    _
  $region49: #{pinn_net_f.1} parent=0 // pred_fallthru
    _
  // Predicated region
  $region50: #{pinn_net_f.1} parent=0 // pred_check
    _
  $region51: #{pinn_net_f.1} parent=0 // pred_check_branch
    %1776 = sbr.rel (0) target = $region53
  $region52: #{pinn_net_f.1} parent=0 // pred_region
    _
  $region53: #{pinn_net_f.1} parent=0 // pred_fallthru
    _
  // Predicated region
  $region54: #{pinn_net_f.1} parent=0 // pred_check
    _
  $region55: #{pinn_net_f.1} parent=0 // pred_check_branch
    %1778 = sbr.rel (0) target = $region57
  $region56: #{pinn_net_f.1} parent=0 // pred_region
    _
  $region57: #{pinn_net_f.1} parent=0 // pred_fallthru
    _

</llo_original>
